<compile_context>
chip_gen: v5e
topology: v5e:2x2
jax: 0.10.0
libtpu: 0.0.40
codegen_flags: <defaults>
</compile_context>

<pallas_src>
from functools import partial

import numpy as np
import jax
import jax.numpy as jnp
from jax.experimental import pallas as pl
from jax.experimental.pallas import tpu as pltpu


# ----------------------------------------------------------------------------
# helpers
# ----------------------------------------------------------------------------
def _round_up(x, m):
    return ((x + m - 1) // m) * m


def _pick_tile(n, bytes_per_unit, budget_bytes=24 * 1024 * 1024):
    """Largest divisor of `n` whose double-buffered footprint fits the VMEM budget.

    The tile lands on a second-to-last block dim in at least one spec, so it must be
    a multiple of 8 (sublane) or equal to the full extent `n`.
    """
    cands = [t for t in range(1, n + 1)
             if n % t == 0 and (t % 8 == 0 or t == n)
             and 2 * t * bytes_per_unit <= budget_bytes]
    if cands:
        return max(cands)
    # Fallback (tiny / awkward extents): stay legal; vmem_limit below has headroom.
    return 8 if n % 8 == 0 else n


def _window_spans(H, W, crop_size, stride):
    """Sliding-window (y1,y2)/(x1,x2) spans, identical to the torch slide_inference."""
    h_crop, w_crop = crop_size
    h_stride, w_stride = stride
    h_grids = max(H - h_crop + h_stride - 1, 0) // h_stride + 1
    w_grids = max(W - w_crop + w_stride - 1, 0) // w_stride + 1
    ys, xs = [], []
    for hi in range(h_grids):
        y2 = min(hi * h_stride + h_crop, H)
        ys.append((max(y2 - h_crop, 0), y2))
    for wi in range(w_grids):
        x2 = min(wi * w_stride + w_crop, W)
        xs.append((max(x2 - w_crop, 0), x2))
    return ys, xs


def _count_matrix(H, W, crop_size, stride):
    """count_mat is a static function of (H, W, crop, stride): compute it on host."""
    ys, xs = _window_spans(H, W, crop_size, stride)
    cnt = np.zeros((H, W), np.float32)
    for y1, y2 in ys:
        for x1, x2 in xs:
            cnt[y1:y2, x1:x2] += 1.0
    return cnt


# ----------------------------------------------------------------------------
# Kernel A: tiled 1x1-conv feature extraction (MXU matmul, classes lane-dense)
# ----------------------------------------------------------------------------
def _seg_kernel(img_ref, w_ref, b_ref, seg_ref):
    # img_ref: (1, rT, C) pixels x channels;  w: (C, NCP);  b: (1, NCP)
    x = img_ref[0]                                                      # (rT, C) f32
    seg_ref[0] = (jnp.dot(x, w_ref[...], preferred_element_type=jnp.float32)
                  + b_ref[...])                                         # (rT, NCP)


def extract_seg_pallas(img_flat, w_pad, b_pad):
    """img_flat: (B, H*W, C) f32 -> seg: (B, H*W, NCP) f32 (NCP = classes padded to 128x)."""
    B, P, C = img_flat.shape
    NCP = w_pad.shape[1]
    bytes_per_pixel = 4 * (C + NCP)                   # img row + seg row, f32
    rT = _pick_tile(P, bytes_per_pixel)
    grid = (B, P // rT)
    return pl.pallas_call(
        _seg_kernel,
        out_shape=jax.ShapeDtypeStruct((B, P, NCP), jnp.float32),
        grid=grid,
        in_specs=[pl.BlockSpec((1, rT, C), lambda b, r: (b, r, 0)),
                  pl.BlockSpec((C, NCP), lambda b, r: (0, 0)),
                  pl.BlockSpec((1, NCP), lambda b, r: (0, 0))],
        out_specs=pl.BlockSpec((1, rT, NCP), lambda b, r: (b, r, 0)),
        compiler_params=pltpu.CompilerParams(
            dimension_semantics=("parallel", "parallel"),
            vmem_limit_bytes=48 * 1024 * 1024),
    )(img_flat, w_pad, b_pad)


# ----------------------------------------------------------------------------
# Kernel B: fused softmax (over classes) + argmax (over classes), tiled over rows
# ----------------------------------------------------------------------------
def _head_kernel(seg_ref, soft_ref, pred_ref, *, num_classes):
    x = seg_ref[0]                                                      # (hT, W, NCP) f32
    NCP = x.shape[-1]
    cls = jax.lax.broadcasted_iota(jnp.int32, x.shape, 2)
    xm = jnp.where(cls < num_classes, x, -jnp.inf)                      # mask lane padding
    m = jnp.max(xm, axis=-1, keepdims=True)
    e = jnp.exp(xm - m)                                                 # pad lanes -> 0
    s = jnp.sum(e, axis=-1, keepdims=True)
    soft_ref[0] = e * (1.0 / s)
    # first-max index over valid classes (matches torch / jnp.argmax tie-break)
    pred_ref[0] = jnp.min(jnp.where(xm == m, cls, NCP), axis=-1).astype(jnp.int32)


def softmax_argmax_pallas(seg_pad, num_classes):
    """seg_pad: (B, H, W, NCP) f32 -> (softmax (B,H,W,NCP) f32, argmax (B,H,W) int32)."""
    B, H, W, NCP = seg_pad.shape
    bytes_per_row = 4 * W * (2 * NCP + 1)             # seg in + soft out + pred out
    hT = _pick_tile(H, bytes_per_row)
    grid = (B, H // hT)
    soft, pred = pl.pallas_call(
        partial(_head_kernel, num_classes=num_classes),
        out_shape=(jax.ShapeDtypeStruct((B, H, W, NCP), jnp.float32),
                   jax.ShapeDtypeStruct((B, H, W), jnp.int32)),
        grid=grid,
        in_specs=[pl.BlockSpec((1, hT, W, NCP), lambda b, r: (b, r, 0, 0))],
        out_specs=(pl.BlockSpec((1, hT, W, NCP), lambda b, r: (b, r, 0, 0)),
                   pl.BlockSpec((1, hT, W), lambda b, r: (b, r, 0))),
        compiler_params=pltpu.CompilerParams(
            dimension_semantics=("parallel", "parallel"),
            vmem_limit_bytes=48 * 1024 * 1024),
    )(seg_pad)
    return soft, pred


# ----------------------------------------------------------------------------
# Module wrapper mirroring the PyTorch ExtractorModel.forward semantics
# ----------------------------------------------------------------------------
class _DC:  # tiny stand-in for mmcv DataContainer
    def __init__(self, data):
        self.data = data


class ExtractorModelPallas:
    def __init__(self, conv_w, conv_b, num_classes=150,
                 crop_size=(512, 512), stride=(341, 341)):
        # synthetic extractor.extract_feature == 1x1 conv (C -> num_classes)
        self.num_classes = num_classes
        self.num_classes_padded = _round_up(num_classes, 128)   # 150 -> 256 (lane-dense)
        pad = self.num_classes_padded - num_classes
        self.w_pad = jnp.pad(conv_w.astype(jnp.float32), ((0, 0), (0, pad)))
        self.b_pad = jnp.pad(conv_b.astype(jnp.float32).reshape(1, -1), ((0, 0), (0, pad)))
        self.test_cfg = {'mode': 'slide', 'crop_size': crop_size, 'stride': stride}
        # Perf note: if the per-window accumulation path is ever restored, prefer a
        # stride that is a multiple of 8 (e.g. 344) so window x-offsets stay
        # sublane-aligned.

    def slide_inference(self, img_nchw, img_meta, rescale):
        B, C, H, W = img_nchw.shape
        crop, stride = self.test_cfg['crop_size'], self.test_cfg['stride']

        # Static host-side replacement for `assert (count_mat == 0).sum() == 0`
        # (no device->host sync between the two pallas_calls).
        cnt = _count_matrix(H, W, crop, stride)
        assert int((cnt == 0).sum()) == 0

        # With the synthetic, position-independent 1x1-conv extractor,
        #   preds / count_mat == conv1x1(img)   (exactly),
        # so the per-window accumulate + divide collapses to a single tiled matmul
        # pass over the image.
        # TODO(synk): restore the per-window accumulation path (scalar-prefetched
        # window offsets + tiled HBM accumulator with manual DMA) if a real
        # crop-dependent extractor replaces the synthetic 1x1 conv.
        img_nhwc = jnp.transpose(img_nchw, (0, 2, 3, 1)).astype(jnp.float32)
        img_flat = img_nhwc.reshape(B, H * W, C)                 # free, row-major
        seg_flat = extract_seg_pallas(img_flat, self.w_pad, self.b_pad)
        seg_pad = seg_flat.reshape(B, H, W, self.num_classes_padded)

        if rescale:
            rs_h, rs_w = img_meta[0]['img_shape'][:2]
            seg_pad = seg_pad[:, :rs_h, :rs_w, :]
            oh, ow = img_meta[0]['ori_shape'][:2]
            if (oh, ow) != (seg_pad.shape[1], seg_pad.shape[2]):
                # TODO(synk): bilinear resize as a Pallas kernel; XLA glue fallback.
                seg_pad = jax.image.resize(
                    seg_pad, (seg_pad.shape[0], oh, ow, seg_pad.shape[3]), 'linear')
        return seg_pad   # NHWC, class dim padded to a multiple of 128

    def forward(self, img, img_metas, return_loss=False):
        metas = [a.data[0] for a in img_metas]
        seg_pad = self.slide_inference(img[0], img_meta=metas[0], rescale=True)
        soft_pad, seg_pred = softmax_argmax_pallas(seg_pad, self.num_classes)

        # Stay NHWC end-to-end (classes-last == torch's dim=1); only slice off the
        # lane padding.  Flips map torch dims (3, 2) -> NHWC axes (2, 1).
        output = soft_pad[..., :self.num_classes]
        flip = metas[0][0]['flip']
        if flip:
            flip_direction = metas[0][0]['flip_direction']
            assert flip_direction in ['horizontal', 'vertical']
            if flip_direction == 'horizontal':
                output = jnp.flip(output, axis=2)
            elif flip_direction == 'vertical':
                output = jnp.flip(output, axis=1)

        jax.block_until_ready((output, seg_pred))
        self._last_seg_logit_nhwc = seg_pad[..., :self.num_classes]   # kept for testing
        self._last_output_nhwc = output
        seg_pred = np.asarray(seg_pred)                               # .cpu().numpy()
        return list(seg_pred)


# ----------------------------------------------------------------------------
# Pure-JAX reference (full sliding-window accumulate / divide) for verification
# ----------------------------------------------------------------------------
def _reference(img_nchw, w, b, crop_size, stride, num_classes):
    h_stride, w_stride = stride
    h_crop, w_crop = crop_size
    B, C, H, W = img_nchw.shape
    h_grids = max(H - h_crop + h_stride - 1, 0) // h_stride + 1
    w_grids = max(W - w_crop + w_stride - 1, 0) // w_stride + 1
    preds = jnp.zeros((B, num_classes, H, W), jnp.float32)
    cnt = jnp.zeros((B, 1, H, W), jnp.float32)
    for h_idx in range(h_grids):
        for w_idx in range(w_grids):
            y2 = min(h_idx * h_stride + h_crop, H); y1 = max(y2 - h_crop, 0)
            x2 = min(w_idx * w_stride + w_crop, W); x1 = max(x2 - w_crop, 0)
            crop = img_nchw[:, :, y1:y2, x1:x2]
            logit = jnp.einsum('bchw,cn->bnhw', crop, w,
                               precision=jax.lax.Precision.HIGHEST) \
                + b.reshape(1, num_classes, 1, 1)
            preds = preds.at[:, :, y1:y2, x1:x2].add(logit)
            cnt = cnt.at[:, :, y1:y2, x1:x2].add(1.0)
    seg = preds / cnt
    soft = jax.nn.softmax(seg, axis=1)
    pred = jnp.argmax(seg, axis=1)
    return seg, soft, pred


if __name__ == "__main__":
    key = jax.random.PRNGKey(0)
    k_img, k_w, k_b = jax.random.split(key, 3)

    # Small shapes (scaled down from the module's 512/341 crop/stride config).
    B, C, H, W = 2, 4, 32, 32
    NUM_CLASSES = 150
    CROP = (16, 16)
    STRIDE = (8, 8)

    img = jax.random.normal(k_img, (B, C, H, W), jnp.float32)
    conv_w = 0.05 * jax.random.normal(k_w, (C, NUM_CLASSES), jnp.float32)
    conv_b = 0.01 * jax.random.normal(k_b, (1, NUM_CLASSES), jnp.float32)

    img_metas = [_DC([[{'flip': False,
                        'flip_direction': 'horizontal',
                        'img_shape': (H, W, 3),
                        'ori_shape': (H, W, 3),
                        'scale_factor': 1.0}]])]

    model = ExtractorModelPallas(conv_w, conv_b, num_classes=NUM_CLASSES,
                                 crop_size=CROP, stride=STRIDE)
    seg_pred_list = model.forward([img], img_metas, return_loss=False)
    jax.block_until_ready((model._last_output_nhwc, model._last_seg_logit_nhwc))

    # Verify against the full sliding-window pure-JAX reference.
    ref_seg, ref_soft, ref_pred = _reference(img, conv_w, conv_b, CROP, STRIDE, NUM_CLASSES)
    got_seg = jnp.transpose(model._last_seg_logit_nhwc, (0, 3, 1, 2))   # NCHW for compare
    got_soft = jnp.transpose(model._last_output_nhwc, (0, 3, 1, 2))
    np.testing.assert_allclose(np.asarray(got_seg), np.asarray(ref_seg), atol=1e-4, rtol=1e-4)
    np.testing.assert_allclose(np.asarray(got_soft), np.asarray(ref_soft), atol=1e-4, rtol=1e-4)
    # Argmax: tie-break-stable check against argmax of the kernel's own seg logits
    # (which were themselves verified against the sliding-window reference above).
    chk_pred = np.asarray(jnp.argmax(got_seg, axis=1))
    assert all(np.array_equal(p, cp) for p, cp in zip(seg_pred_list, chk_pred))
    # Sanity: predictions agree with the reference everywhere the max is unambiguous.
    assert np.mean(chk_pred == np.asarray(ref_pred)) > 0.999

    print("KERNEL_OK")
</pallas_src>

<mosaic_0001>
module attributes {stable_mosaic.version = 11 : i64} {
  func.func @_seg_kernel(%arg0: i32, %arg1: i32, %arg2: memref<1x1024x4xf32, #tpu.memory_space<vmem>>, %arg3: memref<4x256xf32, #tpu.memory_space<vmem>>, %arg4: memref<1x256xf32, #tpu.memory_space<vmem>>, %arg5: memref<1x1024x256xf32, #tpu.memory_space<vmem>>) attributes {dimension_semantics = [#tpu.dimension_semantics<parallel>, #tpu.dimension_semantics<parallel>], iteration_bounds = array<i64: 2, 1>, scalar_prefetch = 0 : i64, scratch_operands = 0 : i64, tpu.core_type = #tpu.core_type<tc>, window_params = [{transform_indices = @transform_0, window_bounds = array<i64: 1, 1024, 4>}, {pipeline_mode = #tpu.pipeline_mode<synchronous>, transform_indices = @transform_1, window_bounds = array<i64: 4, 256>}, {pipeline_mode = #tpu.pipeline_mode<synchronous>, transform_indices = @transform_2, window_bounds = array<i64: 1, 256>}, {transform_indices = @transform_3, window_bounds = array<i64: 1, 1024, 256>}]} {
    %c0 = arith.constant 0 : index
    %c0_0 = arith.constant 0 : index
    %c0_1 = arith.constant 0 : index
    %0 = vector.load %arg2[%c0, %c0_0, %c0_1] : memref<1x1024x4xf32, #tpu.memory_space<vmem>>, vector<1x1024x4xf32>
    %1 = vector.shape_cast %0 : vector<1x1024x4xf32> to vector<1024x4xf32>
    %c0_2 = arith.constant 0 : index
    %c0_3 = arith.constant 0 : index
    %2 = vector.load %arg3[%c0_2, %c0_3] : memref<4x256xf32, #tpu.memory_space<vmem>>, vector<4x256xf32>
    %cst = arith.constant dense<0.000000e+00> : vector<1024x256xf32>
    %3 = tpu.matmul %1, %2, %cst {dimension_numbers = #tpu.dot_dimension_numbers<[1], [0], [0], [1], [0, 0, 1, 1], [], []>} : vector<1024x4xf32>, vector<4x256xf32>, vector<1024x256xf32> -> vector<1024x256xf32>
    %c0_4 = arith.constant 0 : index
    %c0_5 = arith.constant 0 : index
    %4 = vector.load %arg4[%c0_4, %c0_5] : memref<1x256xf32, #tpu.memory_space<vmem>>, vector<1x256xf32>
    %5 = vector.broadcast %4 : vector<1x256xf32> to vector<1024x256xf32>
    %6 = arith.addf %3, %5 : vector<1024x256xf32>
    %c0_6 = arith.constant 0 : index
    %c0_7 = arith.constant 0 : index
    %c0_8 = arith.constant 0 : index
    %7 = vector.load %arg5[%c0_6, %c0_7, %c0_8] : memref<1x1024x256xf32, #tpu.memory_space<vmem>>, vector<1x1024x256xf32>
    %8 = vector.shape_cast %7 : vector<1x1024x256xf32> to vector<1024x256xf32>
    %9 = vector.shape_cast %6 : vector<1024x256xf32> to vector<1x1024x256xf32>
    tpu.vector_store %arg5[%c0_6, %c0_7, %c0_8], %9 {strides = array<i32>} : memref<1x1024x256xf32, #tpu.memory_space<vmem>>, vector<1x1024x256xf32>,
    return
  }
  func.func @transform_0(%arg0: i32, %arg1: i32) -> (i32, i32, i32) {
    %c0_i32 = arith.constant 0 : i32
    %c0_i32_0 = arith.constant 0 : i32
    return %arg0, %arg1, %c0_i32 : i32, i32, i32
  }
  func.func @transform_1(%arg0: i32, %arg1: i32) -> (i32, i32) {
    %c0_i32 = arith.constant 0 : i32
    %c0_i32_0 = arith.constant 0 : i32
    %c0_i32_1 = arith.constant 0 : i32
    return %c0_i32, %c0_i32_0 : i32, i32
  }
  func.func @transform_2(%arg0: i32, %arg1: i32) -> (i32, i32) {
    %c0_i32 = arith.constant 0 : i32
    %c0_i32_0 = arith.constant 0 : i32
    %c0_i32_1 = arith.constant 0 : i32
    return %c0_i32, %c0_i32_0 : i32, i32
  }
  func.func @transform_3(%arg0: i32, %arg1: i32) -> (i32, i32, i32) {
    %c0_i32 = arith.constant 0 : i32
    %c0_i32_0 = arith.constant 0 : i32
    return %arg0, %arg1, %c0_i32 : i32, i32, i32
  }
}

</mosaic_0001>

<llo_original>
// kernel: tpu_custom_call.1
$region0: #{tpu_custom_call.1}
  #allocation0 [shape = 'u32[]', space=smem, size = 0x4, offset = 0x4, fixed_abs, tag = 'smem constant byte address 0x4 - core index']
  #allocation1 [shape = 'u32[72,128]{1,0:T(1,128)}', space=vmem, size = 0x9000, scoped, tag = 'internal scratch']
  %s0 = inlined_call_operand.vmem [shape: f32[2,1024,4], index: 0, kind: input, shape index: {}]
  %s1 = inlined_call_operand.hbm [shape: f32[4,256], index: 1, kind: input, shape index: {}]
  %s2 = inlined_call_operand.hbm [shape: f32[1,256], index: 2, kind: input, shape index: {}]
  %s3 = inlined_call_operand.hbm [shape: f32[2,1024,256], index: 3, kind: output, shape index: {}]
  %s4 = sld [smem:[#allocation0]]
  $region53: #{tpu_custom_call.1} parent=0
    _
  %s6 = ssub.s32 1, %s4
  %s7 = scalar_select 0, %s6, %s4
  $region1: #{tpu_custom_call.1} parent=0
    #allocation2 [shape = 'u8[4096]{0}', space=vmem, size = 0x1000, scoped, tag = 'input window, operand 1, single buffered']
    #allocation3 [shape = 's32[2]{0}', space=sflag, size = 0x8, scoped, tag = 'scoped memory for tpu_custom_call.1']
    #allocation4 [shape = 's32[2]{0}', space=sflag, size = 0x8, scoped, tag = 'scoped memory for tpu_custom_call.1']
    #allocation5 [shape = 'u8[1024]{0}', space=vmem, size = 0x400, scoped, tag = 'input window, operand 2, single buffered']
    #allocation6 [shape = 's32[1]{0}', space=sflag, size = 0x4, scoped, tag = 'scoped memory for tpu_custom_call.1']
    #allocation7 [shape = 'u8[2097152]{0}', space=vmem, size = 0x200000, scoped, tag = 'output window, operand 0']
    %8 = vsyncpa [#allocation3], 0
    %9 = vsyncpa [#allocation6], 0
    %10 = vsyncpa [#allocation4], 0
    %s11 = scalar_lea.sflag [#allocation4], 1
    %12 = vsyncpa %s11, 0
    loop: start=0, step=1, limit=4
    $region2: #{tpu_custom_call.1} parent=1 // loop_pre_header
      _
    $region3: #{tpu_custom_call.1} parent=1 // loop_header
      %s14 = sphi 0, %s18
      %p15 = scmp.ge.s32.totalorder %s14, 4
      %s21 = sphi 0, %s33
      %s22 = sphi 0, %s29
      %s23 = sphi 0, %s21
      %s24 = sphi 0, %s22
      %s25 = sphi 0, %s23
      %s26 = sphi 0, %s24
      %s38 = sphi 0, %s40
      %s41 = sphi 0, %s38
      %s42 = sphi 0, %s41
      %s58 = sphi 0, %s42
      %s62 = sphi 0, %s62
      %s64 = sphi 0, %s62
      %s65 = sphi 0, %s64
      %s79 = sphi 0, %s65
      %s83 = sphi 0, %s83
      %s85 = sphi 0, %s83
      %s86 = sphi 0, %s85
      %s100 = sphi 0, %s86
      %s108 = sphi 0, %s110
      %s111 = sphi 0, %s108
      %s112 = sphi 0, %s111
      %s128 = sphi 0, %s112
    $region4: #{tpu_custom_call.1} parent=1 // loop_header_branch
      %17 = sbr.rel (%p15) target = $region8
    $region5: #{tpu_custom_call.1} parent=1 // loop_body
      %s19 = ssub.s32 %s14, 1
      %s20 = ssub.s32 %s14, 2
      %s27 = sadd.s32 1, %s22
      %p28 = scmp.ge.s32.totalorder %s27, 1
      %s29 = scalar_select %p28, 0, %s27
      %s30 = sadd.s32 1, %s21
      %s31 = scalar_select %p28, %s30, %s21
      %p32 = scmp.ge.s32.totalorder %s31, 2
      %s33 = scalar_select %p32, 0, %s31
      %s34 = ssub.s32 %s21, %s33
      %s35 = ssub.s32 %s22, %s29
      %s36 = sor.u32 %s34, %s35
      %p37 = scmp.eq.s32.totalorder %s36, 0
      %s39 = sadd.s32 %s38, 1
      %s40 = scalar_select %p37, %s38, %s39
      %p43 = pneg %p37
      %p44 = scmp.eq.s32.totalorder %s14, 1
      %p45 = por %p43, %p44
      %p46 = scmp.ne.s32.totalorder %s38, %s41
      %p47 = scmp.eq.s32.totalorder %s14, 0
      %p48 = por %p46, %p47
      %p49 = scmp.ne.s32.totalorder %s38, %s41
      %p50 = scmp.eq.s32.totalorder %s19, 1
      %p51 = por %p49, %p50
      %p52 = scmp.ne.s32.totalorder %s41, %s42
      %p53 = scmp.eq.s32.totalorder %s19, 0
      %p54 = por %p52, %p53
      %p55 = scmp.ne.s32.totalorder %s41, %s42
      %p56 = scmp.eq.s32.totalorder %s20, 1
      %p57 = por %p55, %p56
      %p59 = scmp.ne.s32.totalorder %s42, %s58
      %p60 = scmp.eq.s32.totalorder %s20, 0
      %p61 = por %p59, %p60
      %s63 = sadd.s32 %s62, 1
      %p66 = scmp.eq.s32.totalorder %s14, 1
      %p67 = scmp.ne.s32.totalorder %s62, %s64
      %p68 = scmp.eq.s32.totalorder %s14, 0
      %p69 = por %p67, %p68
      %p70 = scmp.ne.s32.totalorder %s62, %s64
      %p71 = scmp.eq.s32.totalorder %s19, 1
      %p72 = por %p70, %p71
      %p73 = scmp.ne.s32.totalorder %s64, %s65
      %p74 = scmp.eq.s32.totalorder %s19, 0
      %p75 = por %p73, %p74
      %p76 = scmp.ne.s32.totalorder %s64, %s65
      %p77 = scmp.eq.s32.totalorder %s20, 1
      %p78 = por %p76, %p77
      %p80 = scmp.ne.s32.totalorder %s65, %s79
      %p81 = scmp.eq.s32.totalorder %s20, 0
      %p82 = por %p80, %p81
      %s84 = sadd.s32 %s83, 1
      %p87 = scmp.eq.s32.totalorder %s14, 1
      %p88 = scmp.ne.s32.totalorder %s83, %s85
      %p89 = scmp.eq.s32.totalorder %s14, 0
      %p90 = por %p88, %p89
      %p91 = scmp.ne.s32.totalorder %s83, %s85
      %p92 = scmp.eq.s32.totalorder %s19, 1
      %p93 = por %p91, %p92
      %p94 = scmp.ne.s32.totalorder %s85, %s86
      %p95 = scmp.eq.s32.totalorder %s19, 0
      %p96 = por %p94, %p95
      %p97 = scmp.ne.s32.totalorder %s85, %s86
      %p98 = scmp.eq.s32.totalorder %s20, 1
      %p99 = por %p97, %p98
      %p101 = scmp.ne.s32.totalorder %s86, %s100
      %p102 = scmp.eq.s32.totalorder %s20, 0
      %p103 = por %p101, %p102
      %s104 = ssub.s32 %s21, %s33
      %s105 = ssub.s32 %s22, %s29
      %s106 = sor.u32 %s104, %s105
      %p107 = scmp.eq.s32.totalorder %s106, 0
      %s109 = sadd.s32 %s108, 1
      %s110 = scalar_select %p107, %s108, %s109
      %p113 = pneg %p107
      %p114 = scmp.eq.s32.totalorder %s14, 1
      %p115 = por %p113, %p114
      %p116 = scmp.ne.s32.totalorder %s108, %s111
      %p117 = scmp.eq.s32.totalorder %s14, 0
      %p118 = por %p116, %p117
      %p119 = scmp.ne.s32.totalorder %s108, %s111
      %p120 = scmp.eq.s32.totalorder %s19, 1
      %p121 = por %p119, %p120
      %p122 = scmp.ne.s32.totalorder %s111, %s112
      %p123 = scmp.eq.s32.totalorder %s19, 0
      %p124 = por %p122, %p123
      %p125 = scmp.ne.s32.totalorder %s111, %s112
      %p126 = scmp.eq.s32.totalorder %s20, 1
      %p127 = por %p125, %p126
      %p129 = scmp.ne.s32.totalorder %s112, %s128
      %p130 = scmp.eq.s32.totalorder %s20, 0
      %p131 = por %p129, %p130
      %p132 = scmp.le.s32.totalorder 1, %s14
      %p133 = scmp.lt.s32.totalorder %s14, 3
      %p134 = pnand %p132, %p133
      %p135 = pneg %p134
      // Predicated region
      $region9: #{tpu_custom_call.1} parent=5 // pred_check
        _
      $region10: #{tpu_custom_call.1} parent=5 // pred_check_branch
        %137 = sbr.rel (%p134) target = $region12
      $region11: #{tpu_custom_call.1} parent=5 // pred_region
        %s138 = ssub.s32 %s14, 1
        // Predicated region
        $region13: #{tpu_custom_call.1} parent=11 // pred_check
          %p139 = pneg %p75
        $region14: #{tpu_custom_call.1} parent=11 // pred_check_branch
          %141 = sbr.rel (%p139) target = $region16
        $region15: #{tpu_custom_call.1} parent=11 // pred_region
          %143 = vsyncadd [#allocation3], 0
          %s145 = sshll.u32 %s1, 4
          %s146 = int_to_ptr.hbm [resolvable:$true] %s145
          %s147 = sshll.u32 [#allocation2], 4
          %s148 = int_to_ptr.vmem [resolvable:$true] %s147
          %150 = dma.hbm_to_vmem [thread:$0]  %s146, 128, %s148, [#allocation3]
        $region16: #{tpu_custom_call.1} parent=11 // pred_fallthru
          _
        // Predicated region
        $region17: #{tpu_custom_call.1} parent=11 // pred_check
          %p151 = pneg %p96
        $region18: #{tpu_custom_call.1} parent=11 // pred_check_branch
          %153 = sbr.rel (%p151) target = $region20
        $region19: #{tpu_custom_call.1} parent=11 // pred_region
          %155 = vsyncadd [#allocation6], 0
          %s157 = sshll.u32 %s2, 4
          %s158 = int_to_ptr.hbm [resolvable:$true] %s157
          %s159 = sshll.u32 [#allocation5], 4
          %s160 = int_to_ptr.vmem [resolvable:$true] %s159
          %162 = dma.hbm_to_vmem [thread:$0]  %s158, 32, %s160, [#allocation6]
        $region20: #{tpu_custom_call.1} parent=11 // pred_fallthru
          _
      $region12: #{tpu_custom_call.1} parent=5 // pred_fallthru
        _
      %p163 = scmp.lt.s32.totalorder %s14, 2
      // Predicated region
      $region21: #{tpu_custom_call.1} parent=5 // pred_check
        %p164 = pneg %p163
      $region22: #{tpu_custom_call.1} parent=5 // pred_check_branch
        %166 = sbr.rel (%p164) target = $region24
      $region23: #{tpu_custom_call.1} parent=5 // pred_region
        // Predicated region
        $region25: #{tpu_custom_call.1} parent=23 // pred_check
          %p167 = pneg %p48
        $region26: #{tpu_custom_call.1} parent=23 // pred_check_branch
          %169 = sbr.rel (%p167) target = $region28
        $region27: #{tpu_custom_call.1} parent=23 // pred_region
          %s170 = smul.u32 128, %s22
          %p171 = scmp.lt.s32.totalorder %s21, 1
          %s172 = scalar_select %p171, %s21, 1
          %p173 = scmp.lt.s32.totalorder %s170, 127
          %s174 = scalar_select %p173, %s170, 127
          %s175 = smul.addr %s172, 128
          %s176 = sadd.s32 %s174, %s175
          %s177 = smul.addr %s176, 8
          %s178 = scalar_lea.vmem %s0, %s177
          %s179 = smul.u32 128, %s22
        $region28: #{tpu_custom_call.1} parent=23 // pred_fallthru
          _
      $region24: #{tpu_custom_call.1} parent=5 // pred_fallthru
        _
      %p180 = scmp.le.s32.totalorder 1, %s14
      %p181 = scmp.lt.s32.totalorder %s14, 3
      %p182 = pnand %p180, %p181
      %p183 = pneg %p182
      // Predicated region
      $region29: #{tpu_custom_call.1} parent=5 // pred_check
        _
      $region30: #{tpu_custom_call.1} parent=5 // pred_check_branch
        %185 = sbr.rel (%p182) target = $region32
      $region31: #{tpu_custom_call.1} parent=5 // pred_region
        %s186 = ssub.s32 %s14, 1
        // Predicated region
        $region33: #{tpu_custom_call.1} parent=31 // pred_check
          %p187 = pneg %p75
        $region34: #{tpu_custom_call.1} parent=31 // pred_check_branch
          %189 = sbr.rel (%p187) target = $region36
        $region35: #{tpu_custom_call.1} parent=31 // pred_region
          %191 = dma.done [#allocation3], 128
        $region36: #{tpu_custom_call.1} parent=31 // pred_fallthru
          _
        // Predicated region
        $region37: #{tpu_custom_call.1} parent=31 // pred_check
          %p192 = pneg %p96
        $region38: #{tpu_custom_call.1} parent=31 // pred_check_branch
          %194 = sbr.rel (%p192) target = $region40
        $region39: #{tpu_custom_call.1} parent=31 // pred_region
          %196 = dma.done [#allocation6], 32
        $region40: #{tpu_custom_call.1} parent=31 // pred_fallthru
          _
        %s197 = smul.u32 128, %s24
        %p198 = scmp.lt.s32.totalorder %s23, 1
        %s199 = scalar_select %p198, %s23, 1
        %p200 = scmp.lt.s32.totalorder %s197, 127
        %s201 = scalar_select %p200, %s197, 127
        %s202 = smul.addr %s199, 128
        %s203 = sadd.s32 %s201, %s202
        %s204 = smul.addr %s203, 8
        %s205 = scalar_lea.vmem %s0, %s204
        %p206 = pneg %p54
        %p207 = pneg %p51
        %p208 = pneg %p75
        %p209 = pneg %p72
        %p210 = pneg %p96
        %p211 = pneg %p93
        %p212 = pneg %p124
        %p213 = pneg %p121
        %s214 = sand.u32 %s111, 1
        %s215 = scalar_lea.sflag [#allocation4], %s214
        %s216 = sand.u32 %s111, 1
        %s217 = smul.addr %s216, 2048
        %s218 = scalar_lea.vmem [#allocation7], %s217
        %s219 = smul.u32 128, %s24
        %p220 = scmp.lt.s32.totalorder %s23, 1
        %s221 = scalar_select %p220, %s23, 1
        %p222 = scmp.lt.s32.totalorder %s219, 127
        %s223 = scalar_select %p222, %s219, 127
        %s224 = smul.addr %s221, 128
        %s225 = sadd.s32 %s223, %s224
        %s226 = smul.addr %s225, 8
        %s227 = scalar_lea.vmem %s0, %s226
        %s228 = smul.u32 128, %s24
        %s229 = smul.u32 128, %s24
        %v230 = vld [vmem:[%s227] sm:$0xff]
        %v231 = vld [vmem:[%s227 + $0x8] sm:$0xff]
        %v232 = vld [vmem:[%s227 + $0x10] sm:$0xff]
        %v233 = vld [vmem:[%s227 + $0x18] sm:$0xff]
        %v234 = vld [vmem:[%s227 + $0x20] sm:$0xff]
        %v235 = vld [vmem:[%s227 + $0x28] sm:$0xff]
        %v236 = vld [vmem:[%s227 + $0x30] sm:$0xff]
        %v237 = vld [vmem:[%s227 + $0x38] sm:$0xff]
        %v238 = vld [vmem:[%s227 + $0x40] sm:$0xff]
        %v239 = vld [vmem:[%s227 + $0x48] sm:$0xff]
        %v240 = vld [vmem:[%s227 + $0x50] sm:$0xff]
        %v241 = vld [vmem:[%s227 + $0x58] sm:$0xff]
        %v242 = vld [vmem:[%s227 + $0x60] sm:$0xff]
        %v243 = vld [vmem:[%s227 + $0x68] sm:$0xff]
        %v244 = vld [vmem:[%s227 + $0x70] sm:$0xff]
        %v245 = vld [vmem:[%s227 + $0x78] sm:$0xff]
        %v246 = vld [vmem:[%s227 + $0x80] sm:$0xff]
        %v247 = vld [vmem:[%s227 + $0x88] sm:$0xff]
        %v248 = vld [vmem:[%s227 + $0x90] sm:$0xff]
        %v249 = vld [vmem:[%s227 + $0x98] sm:$0xff]
        %v250 = vld [vmem:[%s227 + $0xa0] sm:$0xff]
        %v251 = vld [vmem:[%s227 + $0xa8] sm:$0xff]
        %v252 = vld [vmem:[%s227 + $0xb0] sm:$0xff]
        %v253 = vld [vmem:[%s227 + $0xb8] sm:$0xff]
        %v254 = vld [vmem:[%s227 + $0xc0] sm:$0xff]
        %v255 = vld [vmem:[%s227 + $0xc8] sm:$0xff]
        %v256 = vld [vmem:[%s227 + $0xd0] sm:$0xff]
        %v257 = vld [vmem:[%s227 + $0xd8] sm:$0xff]
        %v258 = vld [vmem:[%s227 + $0xe0] sm:$0xff]
        %v259 = vld [vmem:[%s227 + $0xe8] sm:$0xff]
        %v260 = vld [vmem:[%s227 + $0xf0] sm:$0xff]
        %v261 = vld [vmem:[%s227 + $0xf8] sm:$0xff]
        %v262 = vld [vmem:[%s227 + $0x100] sm:$0xff]
        %v263 = vld [vmem:[%s227 + $0x108] sm:$0xff]
        %v264 = vld [vmem:[%s227 + $0x110] sm:$0xff]
        %v265 = vld [vmem:[%s227 + $0x118] sm:$0xff]
        %v266 = vld [vmem:[%s227 + $0x120] sm:$0xff]
        %v267 = vld [vmem:[%s227 + $0x128] sm:$0xff]
        %v268 = vld [vmem:[%s227 + $0x130] sm:$0xff]
        %v269 = vld [vmem:[%s227 + $0x138] sm:$0xff]
        %v270 = vld [vmem:[%s227 + $0x140] sm:$0xff]
        %v271 = vld [vmem:[%s227 + $0x148] sm:$0xff]
        %v272 = vld [vmem:[%s227 + $0x150] sm:$0xff]
        %v273 = vld [vmem:[%s227 + $0x158] sm:$0xff]
        %v274 = vld [vmem:[%s227 + $0x160] sm:$0xff]
        %v275 = vld [vmem:[%s227 + $0x168] sm:$0xff]
        %v276 = vld [vmem:[%s227 + $0x170] sm:$0xff]
        %v277 = vld [vmem:[%s227 + $0x178] sm:$0xff]
        %v278 = vld [vmem:[%s227 + $0x180] sm:$0xff]
        %v279 = vld [vmem:[%s227 + $0x188] sm:$0xff]
        %v280 = vld [vmem:[%s227 + $0x190] sm:$0xff]
        %v281 = vld [vmem:[%s227 + $0x198] sm:$0xff]
        %v282 = vld [vmem:[%s227 + $0x1a0] sm:$0xff]
        %v283 = vld [vmem:[%s227 + $0x1a8] sm:$0xff]
        %v284 = vld [vmem:[%s227 + $0x1b0] sm:$0xff]
        %v285 = vld [vmem:[%s227 + $0x1b8] sm:$0xff]
        %v286 = vld [vmem:[%s227 + $0x1c0] sm:$0xff]
        %v287 = vld [vmem:[%s227 + $0x1c8] sm:$0xff]
        %v288 = vld [vmem:[%s227 + $0x1d0] sm:$0xff]
        %v289 = vld [vmem:[%s227 + $0x1d8] sm:$0xff]
        %v290 = vld [vmem:[%s227 + $0x1e0] sm:$0xff]
        %v291 = vld [vmem:[%s227 + $0x1e8] sm:$0xff]
        %v292 = vld [vmem:[%s227 + $0x1f0] sm:$0xff]
        %v293 = vld [vmem:[%s227 + $0x1f8] sm:$0xff]
        %v294 = vld [vmem:[%s227 + $0x200] sm:$0xff]
        %v295 = vld [vmem:[%s227 + $0x208] sm:$0xff]
        %v296 = vld [vmem:[%s227 + $0x210] sm:$0xff]
        %v297 = vld [vmem:[%s227 + $0x218] sm:$0xff]
        %v298 = vld [vmem:[%s227 + $0x220] sm:$0xff]
        %v299 = vld [vmem:[%s227 + $0x228] sm:$0xff]
        %v300 = vld [vmem:[%s227 + $0x230] sm:$0xff]
        %v301 = vld [vmem:[%s227 + $0x238] sm:$0xff]
        %v302 = vld [vmem:[%s227 + $0x240] sm:$0xff]
        %v303 = vld [vmem:[%s227 + $0x248] sm:$0xff]
        %v304 = vld [vmem:[%s227 + $0x250] sm:$0xff]
        %v305 = vld [vmem:[%s227 + $0x258] sm:$0xff]
        %v306 = vld [vmem:[%s227 + $0x260] sm:$0xff]
        %v307 = vld [vmem:[%s227 + $0x268] sm:$0xff]
        %v308 = vld [vmem:[%s227 + $0x270] sm:$0xff]
        %v309 = vld [vmem:[%s227 + $0x278] sm:$0xff]
        %v310 = vld [vmem:[%s227 + $0x280] sm:$0xff]
        %v311 = vld [vmem:[%s227 + $0x288] sm:$0xff]
        %v312 = vld [vmem:[%s227 + $0x290] sm:$0xff]
        %v313 = vld [vmem:[%s227 + $0x298] sm:$0xff]
        %v314 = vld [vmem:[%s227 + $0x2a0] sm:$0xff]
        %v315 = vld [vmem:[%s227 + $0x2a8] sm:$0xff]
        %v316 = vld [vmem:[%s227 + $0x2b0] sm:$0xff]
        %v317 = vld [vmem:[%s227 + $0x2b8] sm:$0xff]
        %v318 = vld [vmem:[%s227 + $0x2c0] sm:$0xff]
        %v319 = vld [vmem:[%s227 + $0x2c8] sm:$0xff]
        %v320 = vld [vmem:[%s227 + $0x2d0] sm:$0xff]
        %v321 = vld [vmem:[%s227 + $0x2d8] sm:$0xff]
        %v322 = vld [vmem:[%s227 + $0x2e0] sm:$0xff]
        %v323 = vld [vmem:[%s227 + $0x2e8] sm:$0xff]
        %v324 = vld [vmem:[%s227 + $0x2f0] sm:$0xff]
        %v325 = vld [vmem:[%s227 + $0x2f8] sm:$0xff]
        %v326 = vld [vmem:[%s227 + $0x300] sm:$0xff]
        %v327 = vld [vmem:[%s227 + $0x308] sm:$0xff]
        %v328 = vld [vmem:[%s227 + $0x310] sm:$0xff]
        %v329 = vld [vmem:[%s227 + $0x318] sm:$0xff]
        %v330 = vld [vmem:[%s227 + $0x320] sm:$0xff]
        %v331 = vld [vmem:[%s227 + $0x328] sm:$0xff]
        %v332 = vld [vmem:[%s227 + $0x330] sm:$0xff]
        %v333 = vld [vmem:[%s227 + $0x338] sm:$0xff]
        %v334 = vld [vmem:[%s227 + $0x340] sm:$0xff]
        %v335 = vld [vmem:[%s227 + $0x348] sm:$0xff]
        %v336 = vld [vmem:[%s227 + $0x350] sm:$0xff]
        %v337 = vld [vmem:[%s227 + $0x358] sm:$0xff]
        %v338 = vld [vmem:[%s227 + $0x360] sm:$0xff]
        %v339 = vld [vmem:[%s227 + $0x368] sm:$0xff]
        %v340 = vld [vmem:[%s227 + $0x370] sm:$0xff]
        %v341 = vld [vmem:[%s227 + $0x378] sm:$0xff]
        %v342 = vld [vmem:[%s227 + $0x380] sm:$0xff]
        %v343 = vld [vmem:[%s227 + $0x388] sm:$0xff]
        %v344 = vld [vmem:[%s227 + $0x390] sm:$0xff]
        %v345 = vld [vmem:[%s227 + $0x398] sm:$0xff]
        %v346 = vld [vmem:[%s227 + $0x3a0] sm:$0xff]
        %v347 = vld [vmem:[%s227 + $0x3a8] sm:$0xff]
        %v348 = vld [vmem:[%s227 + $0x3b0] sm:$0xff]
        %v349 = vld [vmem:[%s227 + $0x3b8] sm:$0xff]
        %v350 = vld [vmem:[%s227 + $0x3c0] sm:$0xff]
        %v351 = vld [vmem:[%s227 + $0x3c8] sm:$0xff]
        %v352 = vld [vmem:[%s227 + $0x3d0] sm:$0xff]
        %v353 = vld [vmem:[%s227 + $0x3d8] sm:$0xff]
        %v354 = vld [vmem:[%s227 + $0x3e0] sm:$0xff]
        %v355 = vld [vmem:[%s227 + $0x3e8] sm:$0xff]
        %v356 = vld [vmem:[%s227 + $0x3f0] sm:$0xff]
        %v357 = vld [vmem:[%s227 + $0x3f8] sm:$0xff]
        %v358 = vld [vmem:[#allocation2] sm:$0xff]
        %v359 = vld [vmem:[#allocation5] sm:$0x3]
        %v361 = vperm.slane %v359, 0
        %v362 = vperm.slane %v359, 1
        %366 = vst [vmem:[#allocation1] ss:$2 sm:$0xff] %v358
        %v367 = vld.sshfl [vmem:[#allocation1] sm:$0xff pattern:$0x75316420]
        %v368 = vld.sshfl [vmem:[#allocation1 + $0x8] sm:$0xff pattern:$0x75316420]
        %vm369 = vcmask 31744
        %v371 = vsel %vm369, %v230, 0
        %v374 = vsel %vm369, %v231, 0
        %v377 = vsel %vm369, %v232, 0
        %v380 = vsel %vm369, %v233, 0
        %v383 = vsel %vm369, %v234, 0
        %v386 = vsel %vm369, %v235, 0
        %v389 = vsel %vm369, %v236, 0
        %v392 = vsel %vm369, %v237, 0
        %v395 = vsel %vm369, %v238, 0
        %v398 = vsel %vm369, %v239, 0
        %v401 = vsel %vm369, %v240, 0
        %v404 = vsel %vm369, %v241, 0
        %v407 = vsel %vm369, %v242, 0
        %v410 = vsel %vm369, %v243, 0
        %v413 = vsel %vm369, %v244, 0
        %v416 = vsel %vm369, %v245, 0
        %v419 = vsel %vm369, %v246, 0
        %v422 = vsel %vm369, %v247, 0
        %v425 = vsel %vm369, %v248, 0
        %v428 = vsel %vm369, %v249, 0
        %v431 = vsel %vm369, %v250, 0
        %v434 = vsel %vm369, %v251, 0
        %v437 = vsel %vm369, %v252, 0
        %v440 = vsel %vm369, %v253, 0
        %v443 = vsel %vm369, %v254, 0
        %v446 = vsel %vm369, %v255, 0
        %v449 = vsel %vm369, %v256, 0
        %v452 = vsel %vm369, %v257, 0
        %v455 = vsel %vm369, %v258, 0
        %v458 = vsel %vm369, %v259, 0
        %v461 = vsel %vm369, %v260, 0
        %v464 = vsel %vm369, %v261, 0
        %v467 = vsel %vm369, %v262, 0
        %v470 = vsel %vm369, %v263, 0
        %v473 = vsel %vm369, %v264, 0
        %v476 = vsel %vm369, %v265, 0
        %v479 = vsel %vm369, %v266, 0
        %v482 = vsel %vm369, %v267, 0
        %v485 = vsel %vm369, %v268, 0
        %v488 = vsel %vm369, %v269, 0
        %v491 = vsel %vm369, %v270, 0
        %v494 = vsel %vm369, %v271, 0
        %v497 = vsel %vm369, %v272, 0
        %v500 = vsel %vm369, %v273, 0
        %v503 = vsel %vm369, %v274, 0
        %v506 = vsel %vm369, %v275, 0
        %v509 = vsel %vm369, %v276, 0
        %v512 = vsel %vm369, %v277, 0
        %v515 = vsel %vm369, %v278, 0
        %v518 = vsel %vm369, %v279, 0
        %v521 = vsel %vm369, %v280, 0
        %v524 = vsel %vm369, %v281, 0
        %v527 = vsel %vm369, %v282, 0
        %v530 = vsel %vm369, %v283, 0
        %v533 = vsel %vm369, %v284, 0
        %v536 = vsel %vm369, %v285, 0
        %v539 = vsel %vm369, %v286, 0
        %v542 = vsel %vm369, %v287, 0
        %v545 = vsel %vm369, %v288, 0
        %v548 = vsel %vm369, %v289, 0
        %v551 = vsel %vm369, %v290, 0
        %v554 = vsel %vm369, %v291, 0
        %v557 = vsel %vm369, %v292, 0
        %v560 = vsel %vm369, %v293, 0
        %v563 = vsel %vm369, %v294, 0
        %v566 = vsel %vm369, %v295, 0
        %v569 = vsel %vm369, %v296, 0
        %v572 = vsel %vm369, %v297, 0
        %v575 = vsel %vm369, %v298, 0
        %v578 = vsel %vm369, %v299, 0
        %v581 = vsel %vm369, %v300, 0
        %v584 = vsel %vm369, %v301, 0
        %v587 = vsel %vm369, %v302, 0
        %v590 = vsel %vm369, %v303, 0
        %v593 = vsel %vm369, %v304, 0
        %v596 = vsel %vm369, %v305, 0
        %v599 = vsel %vm369, %v306, 0
        %v602 = vsel %vm369, %v307, 0
        %v605 = vsel %vm369, %v308, 0
        %v608 = vsel %vm369, %v309, 0
        %v611 = vsel %vm369, %v310, 0
        %v614 = vsel %vm369, %v311, 0
        %v617 = vsel %vm369, %v312, 0
        %v620 = vsel %vm369, %v313, 0
        %v623 = vsel %vm369, %v314, 0
        %v626 = vsel %vm369, %v315, 0
        %v629 = vsel %vm369, %v316, 0
        %v632 = vsel %vm369, %v317, 0
        %v635 = vsel %vm369, %v318, 0
        %v638 = vsel %vm369, %v319, 0
        %v641 = vsel %vm369, %v320, 0
        %v644 = vsel %vm369, %v321, 0
        %v647 = vsel %vm369, %v322, 0
        %v650 = vsel %vm369, %v323, 0
        %v653 = vsel %vm369, %v324, 0
        %v656 = vsel %vm369, %v325, 0
        %v659 = vsel %vm369, %v326, 0
        %v662 = vsel %vm369, %v327, 0
        %v665 = vsel %vm369, %v328, 0
        %v668 = vsel %vm369, %v329, 0
        %v671 = vsel %vm369, %v330, 0
        %v674 = vsel %vm369, %v331, 0
        %v677 = vsel %vm369, %v332, 0
        %v680 = vsel %vm369, %v333, 0
        %v683 = vsel %vm369, %v334, 0
        %v686 = vsel %vm369, %v335, 0
        %v689 = vsel %vm369, %v336, 0
        %v692 = vsel %vm369, %v337, 0
        %v695 = vsel %vm369, %v338, 0
        %v698 = vsel %vm369, %v339, 0
        %v701 = vsel %vm369, %v340, 0
        %v704 = vsel %vm369, %v341, 0
        %v707 = vsel %vm369, %v342, 0
        %v710 = vsel %vm369, %v343, 0
        %v713 = vsel %vm369, %v344, 0
        %v716 = vsel %vm369, %v345, 0
        %v719 = vsel %vm369, %v346, 0
        %v722 = vsel %vm369, %v347, 0
        %v725 = vsel %vm369, %v348, 0
        %v728 = vsel %vm369, %v349, 0
        %v731 = vsel %vm369, %v350, 0
        %v734 = vsel %vm369, %v351, 0
        %v737 = vsel %vm369, %v352, 0
        %v740 = vsel %vm369, %v353, 0
        %v743 = vsel %vm369, %v354, 0
        %v746 = vsel %vm369, %v355, 0
        %v749 = vsel %vm369, %v356, 0
        %v752 = vsel %vm369, %v357, 0
        %vm754 = vcmask 1043456
        %v755 = vsel %vm754, %v367, 0
        %v757 = vsel %vm754, %v368, 0
        %759 = vmatpush.msra.mxu0 0.0
        %760 = vmatpush.msra.mxu0 0.0
        %761 = vmatpush.msra.mxu0 0.0
        %762 = vmatpush.msra.mxu0 0.0
        %763 = vmatpush.msra.mxu0 0.0
        %764 = vmatpush.msra.mxu0 0.0
        %765 = vmatpush.msra.mxu0 0.0
        %766 = vmatpush.msra.mxu0 0.0
        %767 = vmatpush.msra.mxu0 0.0
        %768 = vmatpush.msra.mxu0 0.0
        %769 = vmatpush.msra.mxu0 0.0
        %770 = vmatpush.msra.mxu0 0.0
        %771 = vmatpush.msra.mxu0 0.0
        %772 = vmatpush.msra.mxu0 0.0
        %773 = vmatpush.msra.mxu0 0.0
        %774 = vmatpush.msra.mxu0 %v755
        %775 = vmatmul.f32.gmra.mxu0 %v371
        %v776 = vpop.f32.mrf.mxu0
        %v777 = vadd.f32 %v361, %v776
        %778 = vmatmul.f32.gmra.mxu0 %v374
        %v779 = vpop.f32.mrf.mxu0
        %v780 = vadd.f32 %v361, %v779
        %781 = vmatmul.f32.gmra.mxu0 %v377
        %v782 = vpop.f32.mrf.mxu0
        %v783 = vadd.f32 %v361, %v782
        %784 = vmatmul.f32.gmra.mxu0 %v380
        %v785 = vpop.f32.mrf.mxu0
        %v786 = vadd.f32 %v361, %v785
        %787 = vmatmul.f32.gmra.mxu0 %v383
        %v788 = vpop.f32.mrf.mxu0
        %v789 = vadd.f32 %v361, %v788
        %790 = vmatmul.f32.gmra.mxu0 %v386
        %v791 = vpop.f32.mrf.mxu0
        %v792 = vadd.f32 %v361, %v791
        %793 = vmatmul.f32.gmra.mxu0 %v389
        %v794 = vpop.f32.mrf.mxu0
        %v795 = vadd.f32 %v361, %v794
        %796 = vmatmul.f32.gmra.mxu0 %v392
        %v797 = vpop.f32.mrf.mxu0
        %v798 = vadd.f32 %v361, %v797
        %799 = vmatmul.f32.gmra.mxu0 %v395
        %v800 = vpop.f32.mrf.mxu0
        %v801 = vadd.f32 %v361, %v800
        %802 = vmatmul.f32.gmra.mxu0 %v398
        %v803 = vpop.f32.mrf.mxu0
        %v804 = vadd.f32 %v361, %v803
        %805 = vmatmul.f32.gmra.mxu0 %v401
        %v806 = vpop.f32.mrf.mxu0
        %v807 = vadd.f32 %v361, %v806
        %808 = vmatmul.f32.gmra.mxu0 %v404
        %v809 = vpop.f32.mrf.mxu0
        %v810 = vadd.f32 %v361, %v809
        %811 = vmatmul.f32.gmra.mxu0 %v407
        %v812 = vpop.f32.mrf.mxu0
        %v813 = vadd.f32 %v361, %v812
        %814 = vmatmul.f32.gmra.mxu0 %v410
        %v815 = vpop.f32.mrf.mxu0
        %v816 = vadd.f32 %v361, %v815
        %817 = vmatmul.f32.gmra.mxu0 %v413
        %v818 = vpop.f32.mrf.mxu0
        %v819 = vadd.f32 %v361, %v818
        %820 = vmatmul.f32.gmra.mxu0 %v416
        %v821 = vpop.f32.mrf.mxu0
        %v822 = vadd.f32 %v361, %v821
        %823 = vmatmul.f32.gmra.mxu0 %v419
        %v824 = vpop.f32.mrf.mxu0
        %v825 = vadd.f32 %v361, %v824
        %826 = vmatmul.f32.gmra.mxu0 %v422
        %v827 = vpop.f32.mrf.mxu0
        %v828 = vadd.f32 %v361, %v827
        %829 = vmatmul.f32.gmra.mxu0 %v425
        %v830 = vpop.f32.mrf.mxu0
        %v831 = vadd.f32 %v361, %v830
        %832 = vmatmul.f32.gmra.mxu0 %v428
        %v833 = vpop.f32.mrf.mxu0
        %v834 = vadd.f32 %v361, %v833
        %835 = vmatmul.f32.gmra.mxu0 %v431
        %v836 = vpop.f32.mrf.mxu0
        %v837 = vadd.f32 %v361, %v836
        %838 = vmatmul.f32.gmra.mxu0 %v434
        %v839 = vpop.f32.mrf.mxu0
        %v840 = vadd.f32 %v361, %v839
        %841 = vmatmul.f32.gmra.mxu0 %v437
        %v842 = vpop.f32.mrf.mxu0
        %v843 = vadd.f32 %v361, %v842
        %844 = vmatmul.f32.gmra.mxu0 %v440
        %v845 = vpop.f32.mrf.mxu0
        %v846 = vadd.f32 %v361, %v845
        %847 = vmatmul.f32.gmra.mxu0 %v443
        %v848 = vpop.f32.mrf.mxu0
        %v849 = vadd.f32 %v361, %v848
        %850 = vmatmul.f32.gmra.mxu0 %v446
        %v851 = vpop.f32.mrf.mxu0
        %v852 = vadd.f32 %v361, %v851
        %853 = vmatmul.f32.gmra.mxu0 %v449
        %v854 = vpop.f32.mrf.mxu0
        %v855 = vadd.f32 %v361, %v854
        %856 = vmatmul.f32.gmra.mxu0 %v452
        %v857 = vpop.f32.mrf.mxu0
        %v858 = vadd.f32 %v361, %v857
        %859 = vmatmul.f32.gmra.mxu0 %v455
        %v860 = vpop.f32.mrf.mxu0
        %v861 = vadd.f32 %v361, %v860
        %862 = vmatmul.f32.gmra.mxu0 %v458
        %v863 = vpop.f32.mrf.mxu0
        %v864 = vadd.f32 %v361, %v863
        %865 = vmatmul.f32.gmra.mxu0 %v461
        %v866 = vpop.f32.mrf.mxu0
        %v867 = vadd.f32 %v361, %v866
        %868 = vmatmul.f32.gmra.mxu0 %v464
        %v869 = vpop.f32.mrf.mxu0
        %v870 = vadd.f32 %v361, %v869
        %871 = vmatmul.f32.gmra.mxu0 %v467
        %v872 = vpop.f32.mrf.mxu0
        %v873 = vadd.f32 %v361, %v872
        %874 = vmatmul.f32.gmra.mxu0 %v470
        %v875 = vpop.f32.mrf.mxu0
        %v876 = vadd.f32 %v361, %v875
        %877 = vmatmul.f32.gmra.mxu0 %v473
        %v878 = vpop.f32.mrf.mxu0
        %v879 = vadd.f32 %v361, %v878
        %880 = vmatmul.f32.gmra.mxu0 %v476
        %v881 = vpop.f32.mrf.mxu0
        %v882 = vadd.f32 %v361, %v881
        %883 = vmatmul.f32.gmra.mxu0 %v479
        %v884 = vpop.f32.mrf.mxu0
        %v885 = vadd.f32 %v361, %v884
        %886 = vmatmul.f32.gmra.mxu0 %v482
        %v887 = vpop.f32.mrf.mxu0
        %v888 = vadd.f32 %v361, %v887
        %889 = vmatmul.f32.gmra.mxu0 %v485
        %v890 = vpop.f32.mrf.mxu0
        %v891 = vadd.f32 %v361, %v890
        %892 = vmatmul.f32.gmra.mxu0 %v488
        %v893 = vpop.f32.mrf.mxu0
        %v894 = vadd.f32 %v361, %v893
        %895 = vmatmul.f32.gmra.mxu0 %v491
        %v896 = vpop.f32.mrf.mxu0
        %v897 = vadd.f32 %v361, %v896
        %898 = vmatmul.f32.gmra.mxu0 %v494
        %v899 = vpop.f32.mrf.mxu0
        %v900 = vadd.f32 %v361, %v899
        %901 = vmatmul.f32.gmra.mxu0 %v497
        %v902 = vpop.f32.mrf.mxu0
        %v903 = vadd.f32 %v361, %v902
        %904 = vmatmul.f32.gmra.mxu0 %v500
        %v905 = vpop.f32.mrf.mxu0
        %v906 = vadd.f32 %v361, %v905
        %907 = vmatmul.f32.gmra.mxu0 %v503
        %v908 = vpop.f32.mrf.mxu0
        %v909 = vadd.f32 %v361, %v908
        %910 = vmatmul.f32.gmra.mxu0 %v506
        %v911 = vpop.f32.mrf.mxu0
        %v912 = vadd.f32 %v361, %v911
        %913 = vmatmul.f32.gmra.mxu0 %v509
        %v914 = vpop.f32.mrf.mxu0
        %v915 = vadd.f32 %v361, %v914
        %916 = vmatmul.f32.gmra.mxu0 %v512
        %v917 = vpop.f32.mrf.mxu0
        %v918 = vadd.f32 %v361, %v917
        %919 = vmatmul.f32.gmra.mxu0 %v515
        %v920 = vpop.f32.mrf.mxu0
        %v921 = vadd.f32 %v361, %v920
        %922 = vmatmul.f32.gmra.mxu0 %v518
        %v923 = vpop.f32.mrf.mxu0
        %v924 = vadd.f32 %v361, %v923
        %925 = vmatmul.f32.gmra.mxu0 %v521
        %v926 = vpop.f32.mrf.mxu0
        %v927 = vadd.f32 %v361, %v926
        %928 = vmatmul.f32.gmra.mxu0 %v524
        %v929 = vpop.f32.mrf.mxu0
        %v930 = vadd.f32 %v361, %v929
        %931 = vmatmul.f32.gmra.mxu0 %v527
        %v932 = vpop.f32.mrf.mxu0
        %v933 = vadd.f32 %v361, %v932
        %934 = vmatmul.f32.gmra.mxu0 %v530
        %v935 = vpop.f32.mrf.mxu0
        %v936 = vadd.f32 %v361, %v935
        %937 = vmatmul.f32.gmra.mxu0 %v533
        %v938 = vpop.f32.mrf.mxu0
        %v939 = vadd.f32 %v361, %v938
        %940 = vmatmul.f32.gmra.mxu0 %v536
        %v941 = vpop.f32.mrf.mxu0
        %v942 = vadd.f32 %v361, %v941
        %943 = vmatmul.f32.gmra.mxu0 %v539
        %v944 = vpop.f32.mrf.mxu0
        %v945 = vadd.f32 %v361, %v944
        %946 = vmatmul.f32.gmra.mxu0 %v542
        %v947 = vpop.f32.mrf.mxu0
        %v948 = vadd.f32 %v361, %v947
        %949 = vmatmul.f32.gmra.mxu0 %v545
        %v950 = vpop.f32.mrf.mxu0
        %v951 = vadd.f32 %v361, %v950
        %952 = vmatmul.f32.gmra.mxu0 %v548
        %v953 = vpop.f32.mrf.mxu0
        %v954 = vadd.f32 %v361, %v953
        %955 = vmatmul.f32.gmra.mxu0 %v551
        %v956 = vpop.f32.mrf.mxu0
        %v957 = vadd.f32 %v361, %v956
        %958 = vmatmul.f32.gmra.mxu0 %v554
        %v959 = vpop.f32.mrf.mxu0
        %v960 = vadd.f32 %v361, %v959
        %961 = vmatmul.f32.gmra.mxu0 %v557
        %v962 = vpop.f32.mrf.mxu0
        %v963 = vadd.f32 %v361, %v962
        %964 = vmatmul.f32.gmra.mxu0 %v560
        %v965 = vpop.f32.mrf.mxu0
        %v966 = vadd.f32 %v361, %v965
        %967 = vmatmul.f32.gmra.mxu0 %v563
        %v968 = vpop.f32.mrf.mxu0
        %v969 = vadd.f32 %v361, %v968
        %970 = vmatmul.f32.gmra.mxu0 %v566
        %v971 = vpop.f32.mrf.mxu0
        %v972 = vadd.f32 %v361, %v971
        %973 = vmatmul.f32.gmra.mxu0 %v569
        %v974 = vpop.f32.mrf.mxu0
        %v975 = vadd.f32 %v361, %v974
        %976 = vmatmul.f32.gmra.mxu0 %v572
        %v977 = vpop.f32.mrf.mxu0
        %v978 = vadd.f32 %v361, %v977
        %979 = vmatmul.f32.gmra.mxu0 %v575
        %v980 = vpop.f32.mrf.mxu0
        %v981 = vadd.f32 %v361, %v980
        %982 = vmatmul.f32.gmra.mxu0 %v578
        %v983 = vpop.f32.mrf.mxu0
        %v984 = vadd.f32 %v361, %v983
        %985 = vmatmul.f32.gmra.mxu0 %v581
        %v986 = vpop.f32.mrf.mxu0
        %v987 = vadd.f32 %v361, %v986
        %988 = vmatmul.f32.gmra.mxu0 %v584
        %v989 = vpop.f32.mrf.mxu0
        %v990 = vadd.f32 %v361, %v989
        %991 = vmatmul.f32.gmra.mxu0 %v587
        %v992 = vpop.f32.mrf.mxu0
        %v993 = vadd.f32 %v361, %v992
        %994 = vmatmul.f32.gmra.mxu0 %v590
        %v995 = vpop.f32.mrf.mxu0
        %v996 = vadd.f32 %v361, %v995
        %997 = vmatmul.f32.gmra.mxu0 %v593
        %v998 = vpop.f32.mrf.mxu0
        %v999 = vadd.f32 %v361, %v998
        %1000 = vmatmul.f32.gmra.mxu0 %v596
        %v1001 = vpop.f32.mrf.mxu0
        %v1002 = vadd.f32 %v361, %v1001
        %1003 = vmatmul.f32.gmra.mxu0 %v599
        %v1004 = vpop.f32.mrf.mxu0
        %v1005 = vadd.f32 %v361, %v1004
        %1006 = vmatmul.f32.gmra.mxu0 %v602
        %v1007 = vpop.f32.mrf.mxu0
        %v1008 = vadd.f32 %v361, %v1007
        %1009 = vmatmul.f32.gmra.mxu0 %v605
        %v1010 = vpop.f32.mrf.mxu0
        %v1011 = vadd.f32 %v361, %v1010
        %1012 = vmatmul.f32.gmra.mxu0 %v608
        %v1013 = vpop.f32.mrf.mxu0
        %v1014 = vadd.f32 %v361, %v1013
        %1015 = vmatmul.f32.gmra.mxu0 %v611
        %v1016 = vpop.f32.mrf.mxu0
        %v1017 = vadd.f32 %v361, %v1016
        %1018 = vmatmul.f32.gmra.mxu0 %v614
        %v1019 = vpop.f32.mrf.mxu0
        %v1020 = vadd.f32 %v361, %v1019
        %1021 = vmatmul.f32.gmra.mxu0 %v617
        %v1022 = vpop.f32.mrf.mxu0
        %v1023 = vadd.f32 %v361, %v1022
        %1024 = vmatmul.f32.gmra.mxu0 %v620
        %v1025 = vpop.f32.mrf.mxu0
        %v1026 = vadd.f32 %v361, %v1025
        %1027 = vmatmul.f32.gmra.mxu0 %v623
        %v1028 = vpop.f32.mrf.mxu0
        %v1029 = vadd.f32 %v361, %v1028
        %1030 = vmatmul.f32.gmra.mxu0 %v626
        %v1031 = vpop.f32.mrf.mxu0
        %v1032 = vadd.f32 %v361, %v1031
        %1033 = vmatmul.f32.gmra.mxu0 %v629
        %v1034 = vpop.f32.mrf.mxu0
        %v1035 = vadd.f32 %v361, %v1034
        %1036 = vmatmul.f32.gmra.mxu0 %v632
        %v1037 = vpop.f32.mrf.mxu0
        %v1038 = vadd.f32 %v361, %v1037
        %1039 = vmatmul.f32.gmra.mxu0 %v635
        %v1040 = vpop.f32.mrf.mxu0
        %v1041 = vadd.f32 %v361, %v1040
        %1042 = vmatmul.f32.gmra.mxu0 %v638
        %v1043 = vpop.f32.mrf.mxu0
        %v1044 = vadd.f32 %v361, %v1043
        %1045 = vmatmul.f32.gmra.mxu0 %v641
        %v1046 = vpop.f32.mrf.mxu0
        %v1047 = vadd.f32 %v361, %v1046
        %1048 = vmatmul.f32.gmra.mxu0 %v644
        %v1049 = vpop.f32.mrf.mxu0
        %v1050 = vadd.f32 %v361, %v1049
        %1051 = vmatmul.f32.gmra.mxu0 %v647
        %v1052 = vpop.f32.mrf.mxu0
        %v1053 = vadd.f32 %v361, %v1052
        %1054 = vmatmul.f32.gmra.mxu0 %v650
        %v1055 = vpop.f32.mrf.mxu0
        %v1056 = vadd.f32 %v361, %v1055
        %1057 = vmatmul.f32.gmra.mxu0 %v653
        %v1058 = vpop.f32.mrf.mxu0
        %v1059 = vadd.f32 %v361, %v1058
        %1060 = vmatmul.f32.gmra.mxu0 %v656
        %v1061 = vpop.f32.mrf.mxu0
        %v1062 = vadd.f32 %v361, %v1061
        %1063 = vmatmul.f32.gmra.mxu0 %v659
        %v1064 = vpop.f32.mrf.mxu0
        %v1065 = vadd.f32 %v361, %v1064
        %1066 = vmatmul.f32.gmra.mxu0 %v662
        %v1067 = vpop.f32.mrf.mxu0
        %v1068 = vadd.f32 %v361, %v1067
        %1069 = vmatmul.f32.gmra.mxu0 %v665
        %v1070 = vpop.f32.mrf.mxu0
        %v1071 = vadd.f32 %v361, %v1070
        %1072 = vmatmul.f32.gmra.mxu0 %v668
        %v1073 = vpop.f32.mrf.mxu0
        %v1074 = vadd.f32 %v361, %v1073
        %1075 = vmatmul.f32.gmra.mxu0 %v671
        %v1076 = vpop.f32.mrf.mxu0
        %v1077 = vadd.f32 %v361, %v1076
        %1078 = vmatmul.f32.gmra.mxu0 %v674
        %v1079 = vpop.f32.mrf.mxu0
        %v1080 = vadd.f32 %v361, %v1079
        %1081 = vmatmul.f32.gmra.mxu0 %v677
        %v1082 = vpop.f32.mrf.mxu0
        %v1083 = vadd.f32 %v361, %v1082
        %1084 = vmatmul.f32.gmra.mxu0 %v680
        %v1085 = vpop.f32.mrf.mxu0
        %v1086 = vadd.f32 %v361, %v1085
        %1087 = vmatmul.f32.gmra.mxu0 %v683
        %v1088 = vpop.f32.mrf.mxu0
        %v1089 = vadd.f32 %v361, %v1088
        %1090 = vmatmul.f32.gmra.mxu0 %v686
        %v1091 = vpop.f32.mrf.mxu0
        %v1092 = vadd.f32 %v361, %v1091
        %1093 = vmatmul.f32.gmra.mxu0 %v689
        %v1094 = vpop.f32.mrf.mxu0
        %v1095 = vadd.f32 %v361, %v1094
        %1096 = vmatmul.f32.gmra.mxu0 %v692
        %v1097 = vpop.f32.mrf.mxu0
        %v1098 = vadd.f32 %v361, %v1097
        %1099 = vmatmul.f32.gmra.mxu0 %v695
        %v1100 = vpop.f32.mrf.mxu0
        %v1101 = vadd.f32 %v361, %v1100
        %1102 = vmatmul.f32.gmra.mxu0 %v698
        %v1103 = vpop.f32.mrf.mxu0
        %v1104 = vadd.f32 %v361, %v1103
        %1105 = vmatmul.f32.gmra.mxu0 %v701
        %v1106 = vpop.f32.mrf.mxu0
        %v1107 = vadd.f32 %v361, %v1106
        %1108 = vmatmul.f32.gmra.mxu0 %v704
        %v1109 = vpop.f32.mrf.mxu0
        %v1110 = vadd.f32 %v361, %v1109
        %1111 = vmatmul.f32.gmra.mxu0 %v707
        %v1112 = vpop.f32.mrf.mxu0
        %v1113 = vadd.f32 %v361, %v1112
        %1114 = vmatmul.f32.gmra.mxu0 %v710
        %v1115 = vpop.f32.mrf.mxu0
        %v1116 = vadd.f32 %v361, %v1115
        %1117 = vmatmul.f32.gmra.mxu0 %v713
        %v1118 = vpop.f32.mrf.mxu0
        %v1119 = vadd.f32 %v361, %v1118
        %1120 = vmatmul.f32.gmra.mxu0 %v716
        %v1121 = vpop.f32.mrf.mxu0
        %v1122 = vadd.f32 %v361, %v1121
        %1123 = vmatmul.f32.gmra.mxu0 %v719
        %v1124 = vpop.f32.mrf.mxu0
        %v1125 = vadd.f32 %v361, %v1124
        %1126 = vmatmul.f32.gmra.mxu0 %v722
        %v1127 = vpop.f32.mrf.mxu0
        %v1128 = vadd.f32 %v361, %v1127
        %1129 = vmatmul.f32.gmra.mxu0 %v725
        %v1130 = vpop.f32.mrf.mxu0
        %v1131 = vadd.f32 %v361, %v1130
        %1132 = vmatmul.f32.gmra.mxu0 %v728
        %v1133 = vpop.f32.mrf.mxu0
        %v1134 = vadd.f32 %v361, %v1133
        %1135 = vmatmul.f32.gmra.mxu0 %v731
        %v1136 = vpop.f32.mrf.mxu0
        %v1137 = vadd.f32 %v361, %v1136
        %1138 = vmatmul.f32.gmra.mxu0 %v734
        %v1139 = vpop.f32.mrf.mxu0
        %v1140 = vadd.f32 %v361, %v1139
        %1141 = vmatmul.f32.gmra.mxu0 %v737
        %v1142 = vpop.f32.mrf.mxu0
        %v1143 = vadd.f32 %v361, %v1142
        %1144 = vmatmul.f32.gmra.mxu0 %v740
        %v1145 = vpop.f32.mrf.mxu0
        %v1146 = vadd.f32 %v361, %v1145
        %1147 = vmatmul.f32.gmra.mxu0 %v743
        %v1148 = vpop.f32.mrf.mxu0
        %v1149 = vadd.f32 %v361, %v1148
        %1150 = vmatmul.f32.gmra.mxu0 %v746
        %v1151 = vpop.f32.mrf.mxu0
        %v1152 = vadd.f32 %v361, %v1151
        %1153 = vmatmul.f32.gmra.mxu0 %v749
        %v1154 = vpop.f32.mrf.mxu0
        %v1155 = vadd.f32 %v361, %v1154
        %1156 = vmatmul.f32.gmra.mxu0 %v752
        %v1157 = vpop.f32.mrf.mxu0
        %v1158 = vadd.f32 %v361, %v1157
        %1159 = vdwg.mxu0
        %1160 = vmatpush.msra.mxu0 0.0
        %1161 = vmatpush.msra.mxu0 0.0
        %1162 = vmatpush.msra.mxu0 0.0
        %1163 = vmatpush.msra.mxu0 0.0
        %1164 = vmatpush.msra.mxu0 0.0
        %1165 = vmatpush.msra.mxu0 0.0
        %1166 = vmatpush.msra.mxu0 0.0
        %1167 = vmatpush.msra.mxu0 0.0
        %1168 = vmatpush.msra.mxu0 0.0
        %1169 = vmatpush.msra.mxu0 0.0
        %1170 = vmatpush.msra.mxu0 0.0
        %1171 = vmatpush.msra.mxu0 0.0
        %1172 = vmatpush.msra.mxu0 0.0
        %1173 = vmatpush.msra.mxu0 0.0
        %1174 = vmatpush.msra.mxu0 0.0
        %1175 = vmatpush.msra.mxu0 %v757
        %1176 = vmatmul.f32.gmra.mxu0 %v371
        %v1177 = vpop.f32.mrf.mxu0
        %v1178 = vadd.f32 %v362, %v1177
        %1179 = vmatmul.f32.gmra.mxu0 %v374
        %v1180 = vpop.f32.mrf.mxu0
        %v1181 = vadd.f32 %v362, %v1180
        %1182 = vmatmul.f32.gmra.mxu0 %v377
        %v1183 = vpop.f32.mrf.mxu0
        %v1184 = vadd.f32 %v362, %v1183
        %1185 = vmatmul.f32.gmra.mxu0 %v380
        %v1186 = vpop.f32.mrf.mxu0
        %v1187 = vadd.f32 %v362, %v1186
        %1188 = vmatmul.f32.gmra.mxu0 %v383
        %v1189 = vpop.f32.mrf.mxu0
        %v1190 = vadd.f32 %v362, %v1189
        %1191 = vmatmul.f32.gmra.mxu0 %v386
        %v1192 = vpop.f32.mrf.mxu0
        %v1193 = vadd.f32 %v362, %v1192
        %1194 = vmatmul.f32.gmra.mxu0 %v389
        %v1195 = vpop.f32.mrf.mxu0
        %v1196 = vadd.f32 %v362, %v1195
        %1197 = vmatmul.f32.gmra.mxu0 %v392
        %v1198 = vpop.f32.mrf.mxu0
        %v1199 = vadd.f32 %v362, %v1198
        %1200 = vmatmul.f32.gmra.mxu0 %v395
        %v1201 = vpop.f32.mrf.mxu0
        %v1202 = vadd.f32 %v362, %v1201
        %1203 = vmatmul.f32.gmra.mxu0 %v398
        %v1204 = vpop.f32.mrf.mxu0
        %v1205 = vadd.f32 %v362, %v1204
        %1206 = vmatmul.f32.gmra.mxu0 %v401
        %v1207 = vpop.f32.mrf.mxu0
        %v1208 = vadd.f32 %v362, %v1207
        %1209 = vmatmul.f32.gmra.mxu0 %v404
        %v1210 = vpop.f32.mrf.mxu0
        %v1211 = vadd.f32 %v362, %v1210
        %1212 = vmatmul.f32.gmra.mxu0 %v407
        %v1213 = vpop.f32.mrf.mxu0
        %v1214 = vadd.f32 %v362, %v1213
        %1215 = vmatmul.f32.gmra.mxu0 %v410
        %v1216 = vpop.f32.mrf.mxu0
        %v1217 = vadd.f32 %v362, %v1216
        %1218 = vmatmul.f32.gmra.mxu0 %v413
        %v1219 = vpop.f32.mrf.mxu0
        %v1220 = vadd.f32 %v362, %v1219
        %1221 = vmatmul.f32.gmra.mxu0 %v416
        %v1222 = vpop.f32.mrf.mxu0
        %v1223 = vadd.f32 %v362, %v1222
        %1224 = vmatmul.f32.gmra.mxu0 %v419
        %v1225 = vpop.f32.mrf.mxu0
        %v1226 = vadd.f32 %v362, %v1225
        %1227 = vmatmul.f32.gmra.mxu0 %v422
        %v1228 = vpop.f32.mrf.mxu0
        %v1229 = vadd.f32 %v362, %v1228
        %1230 = vmatmul.f32.gmra.mxu0 %v425
        %v1231 = vpop.f32.mrf.mxu0
        %v1232 = vadd.f32 %v362, %v1231
        %1233 = vmatmul.f32.gmra.mxu0 %v428
        %v1234 = vpop.f32.mrf.mxu0
        %v1235 = vadd.f32 %v362, %v1234
        %1236 = vmatmul.f32.gmra.mxu0 %v431
        %v1237 = vpop.f32.mrf.mxu0
        %v1238 = vadd.f32 %v362, %v1237
        %1239 = vmatmul.f32.gmra.mxu0 %v434
        %v1240 = vpop.f32.mrf.mxu0
        %v1241 = vadd.f32 %v362, %v1240
        %1242 = vmatmul.f32.gmra.mxu0 %v437
        %v1243 = vpop.f32.mrf.mxu0
        %v1244 = vadd.f32 %v362, %v1243
        %1245 = vmatmul.f32.gmra.mxu0 %v440
        %v1246 = vpop.f32.mrf.mxu0
        %v1247 = vadd.f32 %v362, %v1246
        %1248 = vmatmul.f32.gmra.mxu0 %v443
        %v1249 = vpop.f32.mrf.mxu0
        %v1250 = vadd.f32 %v362, %v1249
        %1251 = vmatmul.f32.gmra.mxu0 %v446
        %v1252 = vpop.f32.mrf.mxu0
        %v1253 = vadd.f32 %v362, %v1252
        %1254 = vmatmul.f32.gmra.mxu0 %v449
        %v1255 = vpop.f32.mrf.mxu0
        %v1256 = vadd.f32 %v362, %v1255
        %1257 = vmatmul.f32.gmra.mxu0 %v452
        %v1258 = vpop.f32.mrf.mxu0
        %v1259 = vadd.f32 %v362, %v1258
        %1260 = vmatmul.f32.gmra.mxu0 %v455
        %v1261 = vpop.f32.mrf.mxu0
        %v1262 = vadd.f32 %v362, %v1261
        %1263 = vmatmul.f32.gmra.mxu0 %v458
        %v1264 = vpop.f32.mrf.mxu0
        %v1265 = vadd.f32 %v362, %v1264
        %1266 = vmatmul.f32.gmra.mxu0 %v461
        %v1267 = vpop.f32.mrf.mxu0
        %v1268 = vadd.f32 %v362, %v1267
        %1269 = vmatmul.f32.gmra.mxu0 %v464
        %v1270 = vpop.f32.mrf.mxu0
        %v1271 = vadd.f32 %v362, %v1270
        %1272 = vmatmul.f32.gmra.mxu0 %v467
        %v1273 = vpop.f32.mrf.mxu0
        %v1274 = vadd.f32 %v362, %v1273
        %1275 = vmatmul.f32.gmra.mxu0 %v470
        %v1276 = vpop.f32.mrf.mxu0
        %v1277 = vadd.f32 %v362, %v1276
        %1278 = vmatmul.f32.gmra.mxu0 %v473
        %v1279 = vpop.f32.mrf.mxu0
        %v1280 = vadd.f32 %v362, %v1279
        %1281 = vmatmul.f32.gmra.mxu0 %v476
        %v1282 = vpop.f32.mrf.mxu0
        %v1283 = vadd.f32 %v362, %v1282
        %1284 = vmatmul.f32.gmra.mxu0 %v479
        %v1285 = vpop.f32.mrf.mxu0
        %v1286 = vadd.f32 %v362, %v1285
        %1287 = vmatmul.f32.gmra.mxu0 %v482
        %v1288 = vpop.f32.mrf.mxu0
        %v1289 = vadd.f32 %v362, %v1288
        %1290 = vmatmul.f32.gmra.mxu0 %v485
        %v1291 = vpop.f32.mrf.mxu0
        %v1292 = vadd.f32 %v362, %v1291
        %1293 = vmatmul.f32.gmra.mxu0 %v488
        %v1294 = vpop.f32.mrf.mxu0
        %v1295 = vadd.f32 %v362, %v1294
        %1296 = vmatmul.f32.gmra.mxu0 %v491
        %v1297 = vpop.f32.mrf.mxu0
        %v1298 = vadd.f32 %v362, %v1297
        %1299 = vmatmul.f32.gmra.mxu0 %v494
        %v1300 = vpop.f32.mrf.mxu0
        %v1301 = vadd.f32 %v362, %v1300
        %1302 = vmatmul.f32.gmra.mxu0 %v497
        %v1303 = vpop.f32.mrf.mxu0
        %v1304 = vadd.f32 %v362, %v1303
        %1305 = vmatmul.f32.gmra.mxu0 %v500
        %v1306 = vpop.f32.mrf.mxu0
        %v1307 = vadd.f32 %v362, %v1306
        %1308 = vmatmul.f32.gmra.mxu0 %v503
        %v1309 = vpop.f32.mrf.mxu0
        %v1310 = vadd.f32 %v362, %v1309
        %1311 = vmatmul.f32.gmra.mxu0 %v506
        %v1312 = vpop.f32.mrf.mxu0
        %v1313 = vadd.f32 %v362, %v1312
        %1314 = vmatmul.f32.gmra.mxu0 %v509
        %v1315 = vpop.f32.mrf.mxu0
        %v1316 = vadd.f32 %v362, %v1315
        %1317 = vmatmul.f32.gmra.mxu0 %v512
        %v1318 = vpop.f32.mrf.mxu0
        %v1319 = vadd.f32 %v362, %v1318
        %1320 = vmatmul.f32.gmra.mxu0 %v515
        %v1321 = vpop.f32.mrf.mxu0
        %v1322 = vadd.f32 %v362, %v1321
        %1323 = vmatmul.f32.gmra.mxu0 %v518
        %v1324 = vpop.f32.mrf.mxu0
        %v1325 = vadd.f32 %v362, %v1324
        %1326 = vmatmul.f32.gmra.mxu0 %v521
        %v1327 = vpop.f32.mrf.mxu0
        %v1328 = vadd.f32 %v362, %v1327
        %1329 = vmatmul.f32.gmra.mxu0 %v524
        %v1330 = vpop.f32.mrf.mxu0
        %v1331 = vadd.f32 %v362, %v1330
        %1332 = vmatmul.f32.gmra.mxu0 %v527
        %v1333 = vpop.f32.mrf.mxu0
        %v1334 = vadd.f32 %v362, %v1333
        %1335 = vmatmul.f32.gmra.mxu0 %v530
        %v1336 = vpop.f32.mrf.mxu0
        %v1337 = vadd.f32 %v362, %v1336
        %1338 = vmatmul.f32.gmra.mxu0 %v533
        %v1339 = vpop.f32.mrf.mxu0
        %v1340 = vadd.f32 %v362, %v1339
        %1341 = vmatmul.f32.gmra.mxu0 %v536
        %v1342 = vpop.f32.mrf.mxu0
        %v1343 = vadd.f32 %v362, %v1342
        %1344 = vmatmul.f32.gmra.mxu0 %v539
        %v1345 = vpop.f32.mrf.mxu0
        %v1346 = vadd.f32 %v362, %v1345
        %1347 = vmatmul.f32.gmra.mxu0 %v542
        %v1348 = vpop.f32.mrf.mxu0
        %v1349 = vadd.f32 %v362, %v1348
        %1350 = vmatmul.f32.gmra.mxu0 %v545
        %v1351 = vpop.f32.mrf.mxu0
        %v1352 = vadd.f32 %v362, %v1351
        %1353 = vmatmul.f32.gmra.mxu0 %v548
        %v1354 = vpop.f32.mrf.mxu0
        %v1355 = vadd.f32 %v362, %v1354
        %1356 = vmatmul.f32.gmra.mxu0 %v551
        %v1357 = vpop.f32.mrf.mxu0
        %v1358 = vadd.f32 %v362, %v1357
        %1359 = vmatmul.f32.gmra.mxu0 %v554
        %v1360 = vpop.f32.mrf.mxu0
        %v1361 = vadd.f32 %v362, %v1360
        %1362 = vmatmul.f32.gmra.mxu0 %v557
        %v1363 = vpop.f32.mrf.mxu0
        %v1364 = vadd.f32 %v362, %v1363
        %1365 = vmatmul.f32.gmra.mxu0 %v560
        %v1366 = vpop.f32.mrf.mxu0
        %v1367 = vadd.f32 %v362, %v1366
        %1368 = vmatmul.f32.gmra.mxu0 %v563
        %v1369 = vpop.f32.mrf.mxu0
        %v1370 = vadd.f32 %v362, %v1369
        %1371 = vmatmul.f32.gmra.mxu0 %v566
        %v1372 = vpop.f32.mrf.mxu0
        %v1373 = vadd.f32 %v362, %v1372
        %1374 = vmatmul.f32.gmra.mxu0 %v569
        %v1375 = vpop.f32.mrf.mxu0
        %v1376 = vadd.f32 %v362, %v1375
        %1377 = vmatmul.f32.gmra.mxu0 %v572
        %v1378 = vpop.f32.mrf.mxu0
        %v1379 = vadd.f32 %v362, %v1378
        %1380 = vmatmul.f32.gmra.mxu0 %v575
        %v1381 = vpop.f32.mrf.mxu0
        %v1382 = vadd.f32 %v362, %v1381
        %1383 = vmatmul.f32.gmra.mxu0 %v578
        %v1384 = vpop.f32.mrf.mxu0
        %v1385 = vadd.f32 %v362, %v1384
        %1386 = vmatmul.f32.gmra.mxu0 %v581
        %v1387 = vpop.f32.mrf.mxu0
        %v1388 = vadd.f32 %v362, %v1387
        %1389 = vmatmul.f32.gmra.mxu0 %v584
        %v1390 = vpop.f32.mrf.mxu0
        %v1391 = vadd.f32 %v362, %v1390
        %1392 = vmatmul.f32.gmra.mxu0 %v587
        %v1393 = vpop.f32.mrf.mxu0
        %v1394 = vadd.f32 %v362, %v1393
        %1395 = vmatmul.f32.gmra.mxu0 %v590
        %v1396 = vpop.f32.mrf.mxu0
        %v1397 = vadd.f32 %v362, %v1396
        %1398 = vmatmul.f32.gmra.mxu0 %v593
        %v1399 = vpop.f32.mrf.mxu0
        %v1400 = vadd.f32 %v362, %v1399
        %1401 = vmatmul.f32.gmra.mxu0 %v596
        %v1402 = vpop.f32.mrf.mxu0
        %v1403 = vadd.f32 %v362, %v1402
        %1404 = vmatmul.f32.gmra.mxu0 %v599
        %v1405 = vpop.f32.mrf.mxu0
        %v1406 = vadd.f32 %v362, %v1405
        %1407 = vmatmul.f32.gmra.mxu0 %v602
        %v1408 = vpop.f32.mrf.mxu0
        %v1409 = vadd.f32 %v362, %v1408
        %1410 = vmatmul.f32.gmra.mxu0 %v605
        %v1411 = vpop.f32.mrf.mxu0
        %v1412 = vadd.f32 %v362, %v1411
        %1413 = vmatmul.f32.gmra.mxu0 %v608
        %v1414 = vpop.f32.mrf.mxu0
        %v1415 = vadd.f32 %v362, %v1414
        %1416 = vmatmul.f32.gmra.mxu0 %v611
        %v1417 = vpop.f32.mrf.mxu0
        %v1418 = vadd.f32 %v362, %v1417
        %1419 = vmatmul.f32.gmra.mxu0 %v614
        %v1420 = vpop.f32.mrf.mxu0
        %v1421 = vadd.f32 %v362, %v1420
        %1422 = vmatmul.f32.gmra.mxu0 %v617
        %v1423 = vpop.f32.mrf.mxu0
        %v1424 = vadd.f32 %v362, %v1423
        %1425 = vmatmul.f32.gmra.mxu0 %v620
        %v1426 = vpop.f32.mrf.mxu0
        %v1427 = vadd.f32 %v362, %v1426
        %1428 = vmatmul.f32.gmra.mxu0 %v623
        %v1429 = vpop.f32.mrf.mxu0
        %v1430 = vadd.f32 %v362, %v1429
        %1431 = vmatmul.f32.gmra.mxu0 %v626
        %v1432 = vpop.f32.mrf.mxu0
        %v1433 = vadd.f32 %v362, %v1432
        %1434 = vmatmul.f32.gmra.mxu0 %v629
        %v1435 = vpop.f32.mrf.mxu0
        %v1436 = vadd.f32 %v362, %v1435
        %1437 = vmatmul.f32.gmra.mxu0 %v632
        %v1438 = vpop.f32.mrf.mxu0
        %v1439 = vadd.f32 %v362, %v1438
        %1440 = vmatmul.f32.gmra.mxu0 %v635
        %v1441 = vpop.f32.mrf.mxu0
        %v1442 = vadd.f32 %v362, %v1441
        %1443 = vmatmul.f32.gmra.mxu0 %v638
        %v1444 = vpop.f32.mrf.mxu0
        %v1445 = vadd.f32 %v362, %v1444
        %1446 = vmatmul.f32.gmra.mxu0 %v641
        %v1447 = vpop.f32.mrf.mxu0
        %v1448 = vadd.f32 %v362, %v1447
        %1449 = vmatmul.f32.gmra.mxu0 %v644
        %v1450 = vpop.f32.mrf.mxu0
        %v1451 = vadd.f32 %v362, %v1450
        %1452 = vmatmul.f32.gmra.mxu0 %v647
        %v1453 = vpop.f32.mrf.mxu0
        %v1454 = vadd.f32 %v362, %v1453
        %1455 = vmatmul.f32.gmra.mxu0 %v650
        %v1456 = vpop.f32.mrf.mxu0
        %v1457 = vadd.f32 %v362, %v1456
        %1458 = vmatmul.f32.gmra.mxu0 %v653
        %v1459 = vpop.f32.mrf.mxu0
        %v1460 = vadd.f32 %v362, %v1459
        %1461 = vmatmul.f32.gmra.mxu0 %v656
        %v1462 = vpop.f32.mrf.mxu0
        %v1463 = vadd.f32 %v362, %v1462
        %1464 = vmatmul.f32.gmra.mxu0 %v659
        %v1465 = vpop.f32.mrf.mxu0
        %v1466 = vadd.f32 %v362, %v1465
        %1467 = vmatmul.f32.gmra.mxu0 %v662
        %v1468 = vpop.f32.mrf.mxu0
        %v1469 = vadd.f32 %v362, %v1468
        %1470 = vmatmul.f32.gmra.mxu0 %v665
        %v1471 = vpop.f32.mrf.mxu0
        %v1472 = vadd.f32 %v362, %v1471
        %1473 = vmatmul.f32.gmra.mxu0 %v668
        %v1474 = vpop.f32.mrf.mxu0
        %v1475 = vadd.f32 %v362, %v1474
        %1476 = vmatmul.f32.gmra.mxu0 %v671
        %v1477 = vpop.f32.mrf.mxu0
        %v1478 = vadd.f32 %v362, %v1477
        %1479 = vmatmul.f32.gmra.mxu0 %v674
        %v1480 = vpop.f32.mrf.mxu0
        %v1481 = vadd.f32 %v362, %v1480
        %1482 = vmatmul.f32.gmra.mxu0 %v677
        %v1483 = vpop.f32.mrf.mxu0
        %v1484 = vadd.f32 %v362, %v1483
        %1485 = vmatmul.f32.gmra.mxu0 %v680
        %v1486 = vpop.f32.mrf.mxu0
        %v1487 = vadd.f32 %v362, %v1486
        %1488 = vmatmul.f32.gmra.mxu0 %v683
        %v1489 = vpop.f32.mrf.mxu0
        %v1490 = vadd.f32 %v362, %v1489
        %1491 = vmatmul.f32.gmra.mxu0 %v686
        %v1492 = vpop.f32.mrf.mxu0
        %v1493 = vadd.f32 %v362, %v1492
        %1494 = vmatmul.f32.gmra.mxu0 %v689
        %v1495 = vpop.f32.mrf.mxu0
        %v1496 = vadd.f32 %v362, %v1495
        %1497 = vmatmul.f32.gmra.mxu0 %v692
        %v1498 = vpop.f32.mrf.mxu0
        %v1499 = vadd.f32 %v362, %v1498
        %1500 = vmatmul.f32.gmra.mxu0 %v695
        %v1501 = vpop.f32.mrf.mxu0
        %v1502 = vadd.f32 %v362, %v1501
        %1503 = vmatmul.f32.gmra.mxu0 %v698
        %v1504 = vpop.f32.mrf.mxu0
        %v1505 = vadd.f32 %v362, %v1504
        %1506 = vmatmul.f32.gmra.mxu0 %v701
        %v1507 = vpop.f32.mrf.mxu0
        %v1508 = vadd.f32 %v362, %v1507
        %1509 = vmatmul.f32.gmra.mxu0 %v704
        %v1510 = vpop.f32.mrf.mxu0
        %v1511 = vadd.f32 %v362, %v1510
        %1512 = vmatmul.f32.gmra.mxu0 %v707
        %v1513 = vpop.f32.mrf.mxu0
        %v1514 = vadd.f32 %v362, %v1513
        %1515 = vmatmul.f32.gmra.mxu0 %v710
        %v1516 = vpop.f32.mrf.mxu0
        %v1517 = vadd.f32 %v362, %v1516
        %1518 = vmatmul.f32.gmra.mxu0 %v713
        %v1519 = vpop.f32.mrf.mxu0
        %v1520 = vadd.f32 %v362, %v1519
        %1521 = vmatmul.f32.gmra.mxu0 %v716
        %v1522 = vpop.f32.mrf.mxu0
        %v1523 = vadd.f32 %v362, %v1522
        %1524 = vmatmul.f32.gmra.mxu0 %v719
        %v1525 = vpop.f32.mrf.mxu0
        %v1526 = vadd.f32 %v362, %v1525
        %1527 = vmatmul.f32.gmra.mxu0 %v722
        %v1528 = vpop.f32.mrf.mxu0
        %v1529 = vadd.f32 %v362, %v1528
        %1530 = vmatmul.f32.gmra.mxu0 %v725
        %v1531 = vpop.f32.mrf.mxu0
        %v1532 = vadd.f32 %v362, %v1531
        %1533 = vmatmul.f32.gmra.mxu0 %v728
        %v1534 = vpop.f32.mrf.mxu0
        %v1535 = vadd.f32 %v362, %v1534
        %1536 = vmatmul.f32.gmra.mxu0 %v731
        %v1537 = vpop.f32.mrf.mxu0
        %v1538 = vadd.f32 %v362, %v1537
        %1539 = vmatmul.f32.gmra.mxu0 %v734
        %v1540 = vpop.f32.mrf.mxu0
        %v1541 = vadd.f32 %v362, %v1540
        %1542 = vmatmul.f32.gmra.mxu0 %v737
        %v1543 = vpop.f32.mrf.mxu0
        %v1544 = vadd.f32 %v362, %v1543
        %1545 = vmatmul.f32.gmra.mxu0 %v740
        %v1546 = vpop.f32.mrf.mxu0
        %v1547 = vadd.f32 %v362, %v1546
        %1548 = vmatmul.f32.gmra.mxu0 %v743
        %v1549 = vpop.f32.mrf.mxu0
        %v1550 = vadd.f32 %v362, %v1549
        %1551 = vmatmul.f32.gmra.mxu0 %v746
        %v1552 = vpop.f32.mrf.mxu0
        %v1553 = vadd.f32 %v362, %v1552
        %1554 = vmatmul.f32.gmra.mxu0 %v749
        %v1555 = vpop.f32.mrf.mxu0
        %v1556 = vadd.f32 %v362, %v1555
        %1557 = vmatmul.f32.gmra.mxu0 %v752
        %v1558 = vpop.f32.mrf.mxu0
        %v1559 = vadd.f32 %v362, %v1558
        %1560 = vdwg.mxu0
        %1561 = vst [vmem:[%s218] sm:$0xff] %v777
        %1562 = vst [vmem:[%s218 + $0x8] sm:$0xff] %v1178
        %1563 = vst [vmem:[%s218 + $0x10] sm:$0xff] %v780
        %1564 = vst [vmem:[%s218 + $0x18] sm:$0xff] %v1181
        %1565 = vst [vmem:[%s218 + $0x20] sm:$0xff] %v783
        %1566 = vst [vmem:[%s218 + $0x28] sm:$0xff] %v1184
        %1567 = vst [vmem:[%s218 + $0x30] sm:$0xff] %v786
        %1568 = vst [vmem:[%s218 + $0x38] sm:$0xff] %v1187
        %1569 = vst [vmem:[%s218 + $0x40] sm:$0xff] %v789
        %1570 = vst [vmem:[%s218 + $0x48] sm:$0xff] %v1190
        %1571 = vst [vmem:[%s218 + $0x50] sm:$0xff] %v792
        %1572 = vst [vmem:[%s218 + $0x58] sm:$0xff] %v1193
        %1573 = vst [vmem:[%s218 + $0x60] sm:$0xff] %v795
        %1574 = vst [vmem:[%s218 + $0x68] sm:$0xff] %v1196
        %1575 = vst [vmem:[%s218 + $0x70] sm:$0xff] %v798
        %1576 = vst [vmem:[%s218 + $0x78] sm:$0xff] %v1199
        %1577 = vst [vmem:[%s218 + $0x80] sm:$0xff] %v801
        %1578 = vst [vmem:[%s218 + $0x88] sm:$0xff] %v1202
        %1579 = vst [vmem:[%s218 + $0x90] sm:$0xff] %v804
        %1580 = vst [vmem:[%s218 + $0x98] sm:$0xff] %v1205
        %1581 = vst [vmem:[%s218 + $0xa0] sm:$0xff] %v807
        %1582 = vst [vmem:[%s218 + $0xa8] sm:$0xff] %v1208
        %1583 = vst [vmem:[%s218 + $0xb0] sm:$0xff] %v810
        %1584 = vst [vmem:[%s218 + $0xb8] sm:$0xff] %v1211
        %1585 = vst [vmem:[%s218 + $0xc0] sm:$0xff] %v813
        %1586 = vst [vmem:[%s218 + $0xc8] sm:$0xff] %v1214
        %1587 = vst [vmem:[%s218 + $0xd0] sm:$0xff] %v816
        %1588 = vst [vmem:[%s218 + $0xd8] sm:$0xff] %v1217
        %1589 = vst [vmem:[%s218 + $0xe0] sm:$0xff] %v819
        %1590 = vst [vmem:[%s218 + $0xe8] sm:$0xff] %v1220
        %1591 = vst [vmem:[%s218 + $0xf0] sm:$0xff] %v822
        %1592 = vst [vmem:[%s218 + $0xf8] sm:$0xff] %v1223
        %1593 = vst [vmem:[%s218 + $0x100] sm:$0xff] %v825
        %1594 = vst [vmem:[%s218 + $0x108] sm:$0xff] %v1226
        %1595 = vst [vmem:[%s218 + $0x110] sm:$0xff] %v828
        %1596 = vst [vmem:[%s218 + $0x118] sm:$0xff] %v1229
        %1597 = vst [vmem:[%s218 + $0x120] sm:$0xff] %v831
        %1598 = vst [vmem:[%s218 + $0x128] sm:$0xff] %v1232
        %1599 = vst [vmem:[%s218 + $0x130] sm:$0xff] %v834
        %1600 = vst [vmem:[%s218 + $0x138] sm:$0xff] %v1235
        %1601 = vst [vmem:[%s218 + $0x140] sm:$0xff] %v837
        %1602 = vst [vmem:[%s218 + $0x148] sm:$0xff] %v1238
        %1603 = vst [vmem:[%s218 + $0x150] sm:$0xff] %v840
        %1604 = vst [vmem:[%s218 + $0x158] sm:$0xff] %v1241
        %1605 = vst [vmem:[%s218 + $0x160] sm:$0xff] %v843
        %1606 = vst [vmem:[%s218 + $0x168] sm:$0xff] %v1244
        %1607 = vst [vmem:[%s218 + $0x170] sm:$0xff] %v846
        %1608 = vst [vmem:[%s218 + $0x178] sm:$0xff] %v1247
        %1609 = vst [vmem:[%s218 + $0x180] sm:$0xff] %v849
        %1610 = vst [vmem:[%s218 + $0x188] sm:$0xff] %v1250
        %1611 = vst [vmem:[%s218 + $0x190] sm:$0xff] %v852
        %1612 = vst [vmem:[%s218 + $0x198] sm:$0xff] %v1253
        %1613 = vst [vmem:[%s218 + $0x1a0] sm:$0xff] %v855
        %1614 = vst [vmem:[%s218 + $0x1a8] sm:$0xff] %v1256
        %1615 = vst [vmem:[%s218 + $0x1b0] sm:$0xff] %v858
        %1616 = vst [vmem:[%s218 + $0x1b8] sm:$0xff] %v1259
        %1617 = vst [vmem:[%s218 + $0x1c0] sm:$0xff] %v861
        %1618 = vst [vmem:[%s218 + $0x1c8] sm:$0xff] %v1262
        %1619 = vst [vmem:[%s218 + $0x1d0] sm:$0xff] %v864
        %1620 = vst [vmem:[%s218 + $0x1d8] sm:$0xff] %v1265
        %1621 = vst [vmem:[%s218 + $0x1e0] sm:$0xff] %v867
        %1622 = vst [vmem:[%s218 + $0x1e8] sm:$0xff] %v1268
        %1623 = vst [vmem:[%s218 + $0x1f0] sm:$0xff] %v870
        %1624 = vst [vmem:[%s218 + $0x1f8] sm:$0xff] %v1271
        %1625 = vst [vmem:[%s218 + $0x200] sm:$0xff] %v873
        %1626 = vst [vmem:[%s218 + $0x208] sm:$0xff] %v1274
        %1627 = vst [vmem:[%s218 + $0x210] sm:$0xff] %v876
        %1628 = vst [vmem:[%s218 + $0x218] sm:$0xff] %v1277
        %1629 = vst [vmem:[%s218 + $0x220] sm:$0xff] %v879
        %1630 = vst [vmem:[%s218 + $0x228] sm:$0xff] %v1280
        %1631 = vst [vmem:[%s218 + $0x230] sm:$0xff] %v882
        %1632 = vst [vmem:[%s218 + $0x238] sm:$0xff] %v1283
        %1633 = vst [vmem:[%s218 + $0x240] sm:$0xff] %v885
        %1634 = vst [vmem:[%s218 + $0x248] sm:$0xff] %v1286
        %1635 = vst [vmem:[%s218 + $0x250] sm:$0xff] %v888
        %1636 = vst [vmem:[%s218 + $0x258] sm:$0xff] %v1289
        %1637 = vst [vmem:[%s218 + $0x260] sm:$0xff] %v891
        %1638 = vst [vmem:[%s218 + $0x268] sm:$0xff] %v1292
        %1639 = vst [vmem:[%s218 + $0x270] sm:$0xff] %v894
        %1640 = vst [vmem:[%s218 + $0x278] sm:$0xff] %v1295
        %1641 = vst [vmem:[%s218 + $0x280] sm:$0xff] %v897
        %1642 = vst [vmem:[%s218 + $0x288] sm:$0xff] %v1298
        %1643 = vst [vmem:[%s218 + $0x290] sm:$0xff] %v900
        %1644 = vst [vmem:[%s218 + $0x298] sm:$0xff] %v1301
        %1645 = vst [vmem:[%s218 + $0x2a0] sm:$0xff] %v903
        %1646 = vst [vmem:[%s218 + $0x2a8] sm:$0xff] %v1304
        %1647 = vst [vmem:[%s218 + $0x2b0] sm:$0xff] %v906
        %1648 = vst [vmem:[%s218 + $0x2b8] sm:$0xff] %v1307
        %1649 = vst [vmem:[%s218 + $0x2c0] sm:$0xff] %v909
        %1650 = vst [vmem:[%s218 + $0x2c8] sm:$0xff] %v1310
        %1651 = vst [vmem:[%s218 + $0x2d0] sm:$0xff] %v912
        %1652 = vst [vmem:[%s218 + $0x2d8] sm:$0xff] %v1313
        %1653 = vst [vmem:[%s218 + $0x2e0] sm:$0xff] %v915
        %1654 = vst [vmem:[%s218 + $0x2e8] sm:$0xff] %v1316
        %1655 = vst [vmem:[%s218 + $0x2f0] sm:$0xff] %v918
        %1656 = vst [vmem:[%s218 + $0x2f8] sm:$0xff] %v1319
        %1657 = vst [vmem:[%s218 + $0x300] sm:$0xff] %v921
        %1658 = vst [vmem:[%s218 + $0x308] sm:$0xff] %v1322
        %1659 = vst [vmem:[%s218 + $0x310] sm:$0xff] %v924
        %1660 = vst [vmem:[%s218 + $0x318] sm:$0xff] %v1325
        %1661 = vst [vmem:[%s218 + $0x320] sm:$0xff] %v927
        %1662 = vst [vmem:[%s218 + $0x328] sm:$0xff] %v1328
        %1663 = vst [vmem:[%s218 + $0x330] sm:$0xff] %v930
        %1664 = vst [vmem:[%s218 + $0x338] sm:$0xff] %v1331
        %1665 = vst [vmem:[%s218 + $0x340] sm:$0xff] %v933
        %1666 = vst [vmem:[%s218 + $0x348] sm:$0xff] %v1334
        %1667 = vst [vmem:[%s218 + $0x350] sm:$0xff] %v936
        %1668 = vst [vmem:[%s218 + $0x358] sm:$0xff] %v1337
        %1669 = vst [vmem:[%s218 + $0x360] sm:$0xff] %v939
        %1670 = vst [vmem:[%s218 + $0x368] sm:$0xff] %v1340
        %1671 = vst [vmem:[%s218 + $0x370] sm:$0xff] %v942
        %1672 = vst [vmem:[%s218 + $0x378] sm:$0xff] %v1343
        %1673 = vst [vmem:[%s218 + $0x380] sm:$0xff] %v945
        %1674 = vst [vmem:[%s218 + $0x388] sm:$0xff] %v1346
        %1675 = vst [vmem:[%s218 + $0x390] sm:$0xff] %v948
        %1676 = vst [vmem:[%s218 + $0x398] sm:$0xff] %v1349
        %1677 = vst [vmem:[%s218 + $0x3a0] sm:$0xff] %v951
        %1678 = vst [vmem:[%s218 + $0x3a8] sm:$0xff] %v1352
        %1679 = vst [vmem:[%s218 + $0x3b0] sm:$0xff] %v954
        %1680 = vst [vmem:[%s218 + $0x3b8] sm:$0xff] %v1355
        %1681 = vst [vmem:[%s218 + $0x3c0] sm:$0xff] %v957
        %1682 = vst [vmem:[%s218 + $0x3c8] sm:$0xff] %v1358
        %1683 = vst [vmem:[%s218 + $0x3d0] sm:$0xff] %v960
        %1684 = vst [vmem:[%s218 + $0x3d8] sm:$0xff] %v1361
        %1685 = vst [vmem:[%s218 + $0x3e0] sm:$0xff] %v963
        %1686 = vst [vmem:[%s218 + $0x3e8] sm:$0xff] %v1364
        %1687 = vst [vmem:[%s218 + $0x3f0] sm:$0xff] %v966
        %1688 = vst [vmem:[%s218 + $0x3f8] sm:$0xff] %v1367
        %1689 = vst [vmem:[%s218 + $0x400] sm:$0xff] %v969
        %1690 = vst [vmem:[%s218 + $0x408] sm:$0xff] %v1370
        %1691 = vst [vmem:[%s218 + $0x410] sm:$0xff] %v972
        %1692 = vst [vmem:[%s218 + $0x418] sm:$0xff] %v1373
        %1693 = vst [vmem:[%s218 + $0x420] sm:$0xff] %v975
        %1694 = vst [vmem:[%s218 + $0x428] sm:$0xff] %v1376
        %1695 = vst [vmem:[%s218 + $0x430] sm:$0xff] %v978
        %1696 = vst [vmem:[%s218 + $0x438] sm:$0xff] %v1379
        %1697 = vst [vmem:[%s218 + $0x440] sm:$0xff] %v981
        %1698 = vst [vmem:[%s218 + $0x448] sm:$0xff] %v1382
        %1699 = vst [vmem:[%s218 + $0x450] sm:$0xff] %v984
        %1700 = vst [vmem:[%s218 + $0x458] sm:$0xff] %v1385
        %1701 = vst [vmem:[%s218 + $0x460] sm:$0xff] %v987
        %1702 = vst [vmem:[%s218 + $0x468] sm:$0xff] %v1388
        %1703 = vst [vmem:[%s218 + $0x470] sm:$0xff] %v990
        %1704 = vst [vmem:[%s218 + $0x478] sm:$0xff] %v1391
        %1705 = vst [vmem:[%s218 + $0x480] sm:$0xff] %v993
        %1706 = vst [vmem:[%s218 + $0x488] sm:$0xff] %v1394
        %1707 = vst [vmem:[%s218 + $0x490] sm:$0xff] %v996
        %1708 = vst [vmem:[%s218 + $0x498] sm:$0xff] %v1397
        %1709 = vst [vmem:[%s218 + $0x4a0] sm:$0xff] %v999
        %1710 = vst [vmem:[%s218 + $0x4a8] sm:$0xff] %v1400
        %1711 = vst [vmem:[%s218 + $0x4b0] sm:$0xff] %v1002
        %1712 = vst [vmem:[%s218 + $0x4b8] sm:$0xff] %v1403
        %1713 = vst [vmem:[%s218 + $0x4c0] sm:$0xff] %v1005
        %1714 = vst [vmem:[%s218 + $0x4c8] sm:$0xff] %v1406
        %1715 = vst [vmem:[%s218 + $0x4d0] sm:$0xff] %v1008
        %1716 = vst [vmem:[%s218 + $0x4d8] sm:$0xff] %v1409
        %1717 = vst [vmem:[%s218 + $0x4e0] sm:$0xff] %v1011
        %1718 = vst [vmem:[%s218 + $0x4e8] sm:$0xff] %v1412
        %1719 = vst [vmem:[%s218 + $0x4f0] sm:$0xff] %v1014
        %1720 = vst [vmem:[%s218 + $0x4f8] sm:$0xff] %v1415
        %1721 = vst [vmem:[%s218 + $0x500] sm:$0xff] %v1017
        %1722 = vst [vmem:[%s218 + $0x508] sm:$0xff] %v1418
        %1723 = vst [vmem:[%s218 + $0x510] sm:$0xff] %v1020
        %1724 = vst [vmem:[%s218 + $0x518] sm:$0xff] %v1421
        %1725 = vst [vmem:[%s218 + $0x520] sm:$0xff] %v1023
        %1726 = vst [vmem:[%s218 + $0x528] sm:$0xff] %v1424
        %1727 = vst [vmem:[%s218 + $0x530] sm:$0xff] %v1026
        %1728 = vst [vmem:[%s218 + $0x538] sm:$0xff] %v1427
        %1729 = vst [vmem:[%s218 + $0x540] sm:$0xff] %v1029
        %1730 = vst [vmem:[%s218 + $0x548] sm:$0xff] %v1430
        %1731 = vst [vmem:[%s218 + $0x550] sm:$0xff] %v1032
        %1732 = vst [vmem:[%s218 + $0x558] sm:$0xff] %v1433
        %1733 = vst [vmem:[%s218 + $0x560] sm:$0xff] %v1035
        %1734 = vst [vmem:[%s218 + $0x568] sm:$0xff] %v1436
        %1735 = vst [vmem:[%s218 + $0x570] sm:$0xff] %v1038
        %1736 = vst [vmem:[%s218 + $0x578] sm:$0xff] %v1439
        %1737 = vst [vmem:[%s218 + $0x580] sm:$0xff] %v1041
        %1738 = vst [vmem:[%s218 + $0x588] sm:$0xff] %v1442
        %1739 = vst [vmem:[%s218 + $0x590] sm:$0xff] %v1044
        %1740 = vst [vmem:[%s218 + $0x598] sm:$0xff] %v1445
        %1741 = vst [vmem:[%s218 + $0x5a0] sm:$0xff] %v1047
        %1742 = vst [vmem:[%s218 + $0x5a8] sm:$0xff] %v1448
        %1743 = vst [vmem:[%s218 + $0x5b0] sm:$0xff] %v1050
        %1744 = vst [vmem:[%s218 + $0x5b8] sm:$0xff] %v1451
        %1745 = vst [vmem:[%s218 + $0x5c0] sm:$0xff] %v1053
        %1746 = vst [vmem:[%s218 + $0x5c8] sm:$0xff] %v1454
        %1747 = vst [vmem:[%s218 + $0x5d0] sm:$0xff] %v1056
        %1748 = vst [vmem:[%s218 + $0x5d8] sm:$0xff] %v1457
        %1749 = vst [vmem:[%s218 + $0x5e0] sm:$0xff] %v1059
        %1750 = vst [vmem:[%s218 + $0x5e8] sm:$0xff] %v1460
        %1751 = vst [vmem:[%s218 + $0x5f0] sm:$0xff] %v1062
        %1752 = vst [vmem:[%s218 + $0x5f8] sm:$0xff] %v1463
        %1753 = vst [vmem:[%s218 + $0x600] sm:$0xff] %v1065
        %1754 = vst [vmem:[%s218 + $0x608] sm:$0xff] %v1466
        %1755 = vst [vmem:[%s218 + $0x610] sm:$0xff] %v1068
        %1756 = vst [vmem:[%s218 + $0x618] sm:$0xff] %v1469
        %1757 = vst [vmem:[%s218 + $0x620] sm:$0xff] %v1071
        %1758 = vst [vmem:[%s218 + $0x628] sm:$0xff] %v1472
        %1759 = vst [vmem:[%s218 + $0x630] sm:$0xff] %v1074
        %1760 = vst [vmem:[%s218 + $0x638] sm:$0xff] %v1475
        %1761 = vst [vmem:[%s218 + $0x640] sm:$0xff] %v1077
        %1762 = vst [vmem:[%s218 + $0x648] sm:$0xff] %v1478
        %1763 = vst [vmem:[%s218 + $0x650] sm:$0xff] %v1080
        %1764 = vst [vmem:[%s218 + $0x658] sm:$0xff] %v1481
        %1765 = vst [vmem:[%s218 + $0x660] sm:$0xff] %v1083
        %1766 = vst [vmem:[%s218 + $0x668] sm:$0xff] %v1484
        %1767 = vst [vmem:[%s218 + $0x670] sm:$0xff] %v1086
        %1768 = vst [vmem:[%s218 + $0x678] sm:$0xff] %v1487
        %1769 = vst [vmem:[%s218 + $0x680] sm:$0xff] %v1089
        %1770 = vst [vmem:[%s218 + $0x688] sm:$0xff] %v1490
        %1771 = vst [vmem:[%s218 + $0x690] sm:$0xff] %v1092
        %1772 = vst [vmem:[%s218 + $0x698] sm:$0xff] %v1493
        %1773 = vst [vmem:[%s218 + $0x6a0] sm:$0xff] %v1095
        %1774 = vst [vmem:[%s218 + $0x6a8] sm:$0xff] %v1496
        %1775 = vst [vmem:[%s218 + $0x6b0] sm:$0xff] %v1098
        %1776 = vst [vmem:[%s218 + $0x6b8] sm:$0xff] %v1499
        %1777 = vst [vmem:[%s218 + $0x6c0] sm:$0xff] %v1101
        %1778 = vst [vmem:[%s218 + $0x6c8] sm:$0xff] %v1502
        %1779 = vst [vmem:[%s218 + $0x6d0] sm:$0xff] %v1104
        %1780 = vst [vmem:[%s218 + $0x6d8] sm:$0xff] %v1505
        %1781 = vst [vmem:[%s218 + $0x6e0] sm:$0xff] %v1107
        %1782 = vst [vmem:[%s218 + $0x6e8] sm:$0xff] %v1508
        %1783 = vst [vmem:[%s218 + $0x6f0] sm:$0xff] %v1110
        %1784 = vst [vmem:[%s218 + $0x6f8] sm:$0xff] %v1511
        %1785 = vst [vmem:[%s218 + $0x700] sm:$0xff] %v1113
        %1786 = vst [vmem:[%s218 + $0x708] sm:$0xff] %v1514
        %1787 = vst [vmem:[%s218 + $0x710] sm:$0xff] %v1116
        %1788 = vst [vmem:[%s218 + $0x718] sm:$0xff] %v1517
        %1789 = vst [vmem:[%s218 + $0x720] sm:$0xff] %v1119
        %1790 = vst [vmem:[%s218 + $0x728] sm:$0xff] %v1520
        %1791 = vst [vmem:[%s218 + $0x730] sm:$0xff] %v1122
        %1792 = vst [vmem:[%s218 + $0x738] sm:$0xff] %v1523
        %1793 = vst [vmem:[%s218 + $0x740] sm:$0xff] %v1125
        %1794 = vst [vmem:[%s218 + $0x748] sm:$0xff] %v1526
        %1795 = vst [vmem:[%s218 + $0x750] sm:$0xff] %v1128
        %1796 = vst [vmem:[%s218 + $0x758] sm:$0xff] %v1529
        %1797 = vst [vmem:[%s218 + $0x760] sm:$0xff] %v1131
        %1798 = vst [vmem:[%s218 + $0x768] sm:$0xff] %v1532
        %1799 = vst [vmem:[%s218 + $0x770] sm:$0xff] %v1134
        %1800 = vst [vmem:[%s218 + $0x778] sm:$0xff] %v1535
        %1801 = vst [vmem:[%s218 + $0x780] sm:$0xff] %v1137
        %1802 = vst [vmem:[%s218 + $0x788] sm:$0xff] %v1538
        %1803 = vst [vmem:[%s218 + $0x790] sm:$0xff] %v1140
        %1804 = vst [vmem:[%s218 + $0x798] sm:$0xff] %v1541
        %1805 = vst [vmem:[%s218 + $0x7a0] sm:$0xff] %v1143
        %1806 = vst [vmem:[%s218 + $0x7a8] sm:$0xff] %v1544
        %1807 = vst [vmem:[%s218 + $0x7b0] sm:$0xff] %v1146
        %1808 = vst [vmem:[%s218 + $0x7b8] sm:$0xff] %v1547
        %1809 = vst [vmem:[%s218 + $0x7c0] sm:$0xff] %v1149
        %1810 = vst [vmem:[%s218 + $0x7c8] sm:$0xff] %v1550
        %1811 = vst [vmem:[%s218 + $0x7d0] sm:$0xff] %v1152
        %1812 = vst [vmem:[%s218 + $0x7d8] sm:$0xff] %v1553
        %1813 = vst [vmem:[%s218 + $0x7e0] sm:$0xff] %v1155
        %1814 = vst [vmem:[%s218 + $0x7e8] sm:$0xff] %v1556
        %1815 = vst [vmem:[%s218 + $0x7f0] sm:$0xff] %v1158
        %1816 = vst [vmem:[%s218 + $0x7f8] sm:$0xff] %v1559
        %s1817 = sand.u32 %s111, 1
        %s1818 = scalar_lea.sflag [#allocation4], %s1817
        %s1819 = sand.u32 %s111, 1
        %s1820 = smul.addr %s1819, 2048
        %s1821 = scalar_lea.vmem [#allocation7], %s1820
        // Predicated region
        $region41: #{tpu_custom_call.1} parent=31 // pred_check
          %p1822 = pneg %p121
        $region42: #{tpu_custom_call.1} parent=31 // pred_check_branch
          %1824 = sbr.rel (%p1822) target = $region44
        $region43: #{tpu_custom_call.1} parent=31 // pred_region
          %s1825 = smul.u32 128, %s24
          %1827 = vsyncadd %s1818, 0
          %s1828 = smul.addr %s1825, 2
          %s1829 = smul.addr %s23, 256
          %s1830 = sadd.s32 %s1828, %s1829
          %s1831 = smul.addr %s1830, 8
          %s1832 = scalar_lea.hbm %s3, %s1831
          %s1833 = sshll.u32 %s1821, 4
          %s1834 = int_to_ptr.vmem [resolvable:$true] %s1833
          %s1835 = sshll.u32 %s1832, 4
          %s1836 = int_to_ptr.hbm [resolvable:$true] %s1835
          %1841 = dma.vmem_to_hbm [thread:$0]  %s1834, 32768, %s1836, %s1818, 256, 256, 16
        $region44: #{tpu_custom_call.1} parent=31 // pred_fallthru
          _
      $region32: #{tpu_custom_call.1} parent=5 // pred_fallthru
        _
      %p1842 = scmp.le.s32.totalorder 2, %s14
      // Predicated region
      $region45: #{tpu_custom_call.1} parent=5 // pred_check
        %p1843 = pneg %p1842
      $region46: #{tpu_custom_call.1} parent=5 // pred_check_branch
        %1845 = sbr.rel (%p1843) target = $region48
      $region47: #{tpu_custom_call.1} parent=5 // pred_region
        %s1846 = ssub.s32 %s14, 2
        // Predicated region
        $region49: #{tpu_custom_call.1} parent=47 // pred_check
          %p1847 = pneg %p127
        $region50: #{tpu_custom_call.1} parent=47 // pred_check_branch
          %1849 = sbr.rel (%p1847) target = $region52
        $region51: #{tpu_custom_call.1} parent=47 // pred_region
          %s1850 = sand.u32 %s112, 1
          %s1851 = scalar_lea.sflag [#allocation4], %s1850
          %s1852 = sand.u32 %s112, 1
          %s1853 = smul.addr %s1852, 2048
          %s1854 = scalar_lea.vmem [#allocation7], %s1853
          %1856 = dma.done %s1851, 32768
        $region52: #{tpu_custom_call.1} parent=47 // pred_fallthru
          _
      $region48: #{tpu_custom_call.1} parent=5 // pred_fallthru
        _
    $region6: #{tpu_custom_call.1} parent=1 // loop_footer
      %s18 = sadd.s32 1, %s14
    $region7: #{tpu_custom_call.1} parent=1 // loop_footer_branch
      %13 = sbr.rel target = $region3
    $region8: #{tpu_custom_call.1} parent=1 // loop_exit
      _
    %1857 = vsyncpa [#allocation3], 1
    %s1858 = scalar_lea.sflag [#allocation3], 1
    %1859 = vsyncpa %s1858, 1
    %1860 = vsyncpa [#allocation6], 1
    %1861 = vsyncpa [#allocation4], 1
    %s1862 = scalar_lea.sflag [#allocation4], 1
    %1863 = vsyncpa %s1862, 1

</llo_original>
